<compile_context>
chip_gen: v7x
topology: tpu7x:2x2x1
jax: 0.10.0
libtpu: 0.0.40
codegen_flags: <defaults>
</compile_context>

<pallas_src>
import math
import jax
import jax.numpy as jnp
from jax import lax
from jax.experimental import pallas as pl
from jax.experimental.pallas import tpu as pltpu

# ----------------------------- config (small) --------------------------------
B = 2            # batch
T = 8            # sequence length
C = 32           # n_embd
N_HEAD = 4
DH = C // N_HEAD
N_LAYER = 2
VOCAB = 64
V_PAD = 128      # vocab padded to a full 128-lane store
OUT_ROWS = 8     # sublane-pad the per-batch logits block to a full (8,128) tile
BLOCK_SIZE = 16  # max position embeddings
EPS = 1e-5
INV_SQRT2 = 1.0 / math.sqrt(2.0)


# ----------------------------- kernel helpers --------------------------------
def _layernorm(h, w, b):
    mu = jnp.mean(h, axis=-1, keepdims=True)
    var = jnp.mean((h - mu) ** 2, axis=-1, keepdims=True)
    return (h - mu) * lax.rsqrt(var + EPS) * w + b


# ----------------------------- fused GPT kernel -------------------------------
def gpt_kernel(x_ref,
               ln1w_ref, ln1b_ref, wqkv_ref, bqkv_ref, projw_ref, projb_ref,
               ln2w_ref, ln2b_ref, fcw_ref, fcb_ref, fc2w_ref, fc2b_ref,
               lnfw_ref, lnfb_ref, wte_t_ref,
               o_ref,
               res_ref):
    l = pl.program_id(1)

    @pl.when(l == 0)
    def _():
        res_ref[...] = x_ref[...]            # embeddings -> VMEM residual (T, C)

    x = res_ref[...]                         # (T, C) f32 residual stream
    Tv, Cv = x.shape

    # Causal mask (cheap iota/compare, rebuilt per grid step).
    row = lax.broadcasted_iota(jnp.int32, (Tv, Tv), 0)
    col = lax.broadcasted_iota(jnp.int32, (Tv, Tv), 1)
    causal = (col <= row)[None, :, :]        # (1, T, T)
    neg_big = jnp.float32(-1e30)             # finite -> no NaN from exp

    # ---------------- ln_1 + causal self-attention ----------------
    xn = _layernorm(x, ln1w_ref[...], ln1b_ref[...]).astype(jnp.bfloat16)  # (T,C)
    xh = jnp.broadcast_to(xn[None], (3 * N_HEAD, Tv, Cv))                  # (3H,T,C)
    # Single batched QKV projection; 1/sqrt(DH) already folded into the Q slice.
    qkv = jnp.einsum('htc,hcd->htd', xh, wqkv_ref[...],
                     preferred_element_type=jnp.float32) + bqkv_ref[...]   # (3H,T,DH)
    q = qkv[:N_HEAD]
    k = qkv[N_HEAD:2 * N_HEAD]
    v = qkv[2 * N_HEAD:]

    # Scores / softmax / weighted values, heads batched on the leading axis.
    s = jnp.einsum('hqd,hkd->hqk', q.astype(jnp.bfloat16), k.astype(jnp.bfloat16),
                   preferred_element_type=jnp.float32)                     # (H,T,T)
    s = jnp.where(causal, s, neg_big)
    m = jnp.max(s, axis=-1, keepdims=True)
    p = jnp.exp(s - m)
    p = p / jnp.sum(p, axis=-1, keepdims=True)                             # exact divide
    y = jnp.einsum('hqk,hkd->hqd', p.astype(jnp.bfloat16), v.astype(jnp.bfloat16),
                   preferred_element_type=jnp.float32)                     # (H,T,DH)

    # Per-head output projection (no concat), then reduce over heads.
    yh = jnp.einsum('hqd,hdc->hqc', y.astype(jnp.bfloat16), projw_ref[...],
                    preferred_element_type=jnp.float32)                    # (H,T,C)
    x = x + jnp.sum(yh, axis=0) + projb_ref[...]                           # residual 1

    # ---------------- ln_2 + MLP ----------------
    xn2 = _layernorm(x, ln2w_ref[...], ln2b_ref[...]).astype(jnp.bfloat16)
    hid = jnp.dot(xn2, fcw_ref[...],
                  preferred_element_type=jnp.float32) + fcb_ref[...]
    # exact GELU (erf formulation, matches torch.nn.GELU default)
    # TODO(synk): switch to the tanh approximation on v5e if tolerance allows.
    hid = 0.5 * hid * (1.0 + lax.erf(hid * INV_SQRT2))
    mlp = jnp.dot(hid.astype(jnp.bfloat16), fc2w_ref[...],
                  preferred_element_type=jnp.float32) + fc2b_ref[...]
    x = x + mlp                                                            # residual 2

    res_ref[...] = x

    # ---------------- final LN + tied lm_head (last token only) ----------------
    @pl.when(l == pl.num_programs(1) - 1)
    def _():
        xl = x[Tv - 1:Tv, :]                                               # (1, C)
        xnf = _layernorm(xl, lnfw_ref[...], lnfb_ref[...])
        logits = jnp.dot(xnf.astype(jnp.bfloat16), wte_t_ref[...],         # (C, V_PAD)
                         preferred_element_type=jnp.float32)               # (1, V_PAD)
        o_ref[...] = jnp.broadcast_to(logits, (OUT_ROWS, V_PAD))           # dense (8,128) store


# ----------------------------- pallas_call wrapper -----------------------------
def _layer_spec(shape):
    nd = len(shape)
    return pl.BlockSpec((None,) + tuple(shape[1:]),
                        lambda b, l, _nd=nd: (l,) + (0,) * (_nd - 1))


def _shared_spec(shape):
    nd = len(shape)
    return pl.BlockSpec(tuple(shape), lambda b, l, _nd=nd: (0,) * _nd)


def gpt_forward(input_ids, attention_mask, wte, wpe, kernel_params):
    """Full GPT forward (labels=None path). Returns logits of shape (B, 1, VOCAB)."""
    del attention_mask                       # accepted but unused, as in the PyTorch forward
    bsz, t = input_ids.shape
    tok_emb = wte[input_ids]                 # (B, T, C) gather in plain JAX (glue)
    pos_emb = wpe[:t]                        # (T, C)
    x = (tok_emb + pos_emb[None, :, :]).astype(jnp.float32)   # drop(p=0) == identity

    n_layer = kernel_params[0].shape[0]
    in_specs = [pl.BlockSpec((None, t, C), lambda b, l: (b, 0, 0))]   # embeddings
    for arr in kernel_params[:12]:            # per-layer stacked weights
        in_specs.append(_layer_spec(arr.shape))
    for arr in kernel_params[12:]:            # ln_f + lm_head (shared across layers)
        in_specs.append(_shared_spec(arr.shape))

    out = pl.pallas_call(
        gpt_kernel,
        out_shape=jax.ShapeDtypeStruct((bsz, OUT_ROWS, V_PAD), jnp.float32),
        grid=(bsz, n_layer),
        in_specs=in_specs,
        out_specs=pl.BlockSpec((None, OUT_ROWS, V_PAD), lambda b, l: (b, 0, 0)),
        scratch_shapes=[pltpu.VMEM((t, C), jnp.float32)],       # residual stream
        compiler_params=pltpu.CompilerParams(
            dimension_semantics=("parallel", "arbitrary")),
    )(x, *kernel_params)
    return out[:, 0, :VOCAB][:, None, :]      # (B, 1, VOCAB)


# ----------------------------- parameter init ----------------------------------
def init_params(key):
    std = 0.02
    proj_std = 0.02 / math.sqrt(2 * N_LAYER)       # c_proj special init
    keys = jax.random.split(key, 2 + 4 * N_LAYER)
    wte = std * jax.random.normal(keys[0], (VOCAB, C), jnp.float32)   # tied with lm_head
    wpe = std * jax.random.normal(keys[1], (BLOCK_SIZE, C), jnp.float32)

    blocks = []
    for l in range(N_LAYER):
        k0, k1, k2, k3 = keys[2 + 4 * l: 2 + 4 * (l + 1)]
        blocks.append((
            jnp.ones((1, C), jnp.float32),                                 # ln1 w
            jnp.zeros((1, C), jnp.float32),                                # ln1 b
            std * jax.random.normal(k0, (C, 3 * C), jnp.float32),          # c_attn W (in,out)
            jnp.zeros((1, 3 * C), jnp.float32),                            # c_attn b
            proj_std * jax.random.normal(k1, (C, C), jnp.float32),         # attn c_proj W
            jnp.zeros((1, C), jnp.float32),                                # attn c_proj b
            jnp.ones((1, C), jnp.float32),                                 # ln2 w
            jnp.zeros((1, C), jnp.float32),                                # ln2 b
            std * jax.random.normal(k2, (C, 4 * C), jnp.float32),          # mlp c_fc W
            jnp.zeros((1, 4 * C), jnp.float32),                            # mlp c_fc b
            proj_std * jax.random.normal(k3, (4 * C, C), jnp.float32),     # mlp c_proj W
            jnp.zeros((1, C), jnp.float32),                                # mlp c_proj b
        ))
    lnf_w = jnp.ones((1, C), jnp.float32)
    lnf_b = jnp.zeros((1, C), jnp.float32)
    return wte, wpe, blocks, lnf_w, lnf_b


def prepare_kernel_params(blocks, lnf_w, lnf_b, wte):
    """Host-side restructuring: stack layers, reshape c_attn to a (3*H, C, DH)
    per-head layout (no lane-offset slicing in the kernel), fold the attention
    scale into Q, split c_proj per head, pre-transpose + lane-pad the tied
    lm_head, cast matmul weights to bf16."""
    scale = 1.0 / math.sqrt(DH)
    H = N_HEAD
    ln1w, ln1b, wqkv, bqkv, projw, projb = [], [], [], [], [], []
    ln2w, ln2b, fcw, fcb, fc2w, fc2b = [], [], [], [], [], []
    for (l1w, l1b, attnw, attnb, pw, pb, l2w, l2b, fw, fb, f2w, f2b) in blocks:
        ln1w.append(l1w); ln1b.append(l1b)
        # (C, 3C) -> (3*H, C, DH); section order [q heads..., k heads..., v heads...]
        w = attnw.reshape(C, 3, H, DH).transpose(1, 2, 0, 3).reshape(3 * H, C, DH)
        w = w.at[:H].multiply(scale)                 # fold 1/sqrt(DH) into Q weights
        wqkv.append(w.astype(jnp.bfloat16))
        b = attnb.reshape(3, H, 1, DH).reshape(3 * H, 1, DH)
        b = b.at[:H].multiply(scale)                 # fold 1/sqrt(DH) into Q bias
        bqkv.append(b)
        projw.append(pw.reshape(H, DH, C).astype(jnp.bfloat16))   # per-head c_proj
        projb.append(pb)
        ln2w.append(l2w); ln2b.append(l2b)
        fcw.append(fw.astype(jnp.bfloat16)); fcb.append(fb)
        fc2w.append(f2w.astype(jnp.bfloat16)); fc2b.append(f2b)

    stack = lambda xs: jnp.stack(xs, axis=0)
    wte_t = wte.T.astype(jnp.bfloat16)                            # tied lm_head (C, V)
    wte_t_pad = jnp.zeros((C, V_PAD), jnp.bfloat16).at[:, :VOCAB].set(wte_t)
    return (stack(ln1w), stack(ln1b), stack(wqkv), stack(bqkv),
            stack(projw), stack(projb), stack(ln2w), stack(ln2b),
            stack(fcw), stack(fcb), stack(fc2w), stack(fc2b),
            lnf_w, lnf_b, wte_t_pad)


# ----------------------------------- main ---------------------------------------
if __name__ == "__main__":
    key = jax.random.PRNGKey(0)
    kp, ki = jax.random.split(key)
    wte, wpe, blocks, lnf_w, lnf_b = init_params(kp)
    kernel_params = prepare_kernel_params(blocks, lnf_w, lnf_b, wte)

    input_ids = jax.random.randint(ki, (B, T), 0, VOCAB, dtype=jnp.int32)
    attention_mask = jnp.ones((B, T), jnp.int32)

    logits = gpt_forward(input_ids, attention_mask, wte, wpe, kernel_params)
    logits = jax.block_until_ready(logits)
    assert logits.shape == (B, 1, VOCAB)
    assert bool(jnp.all(jnp.isfinite(logits)))
    print("KERNEL_OK")
</pallas_src>

<mosaic_0001>
module attributes {stable_mosaic.version = 11 : i64} {
  func.func @gpt_kernel(%arg0: i32, %arg1: i32, %arg2: memref<1x8x32xf32, #tpu.memory_space<vmem>>, %arg3: memref<1x1x32xf32, #tpu.memory_space<vmem>>, %arg4: memref<1x1x32xf32, #tpu.memory_space<vmem>>, %arg5: memref<1x12x32x8xbf16, #tpu.memory_space<vmem>>, %arg6: memref<1x12x1x8xf32, #tpu.memory_space<vmem>>, %arg7: memref<1x4x8x32xbf16, #tpu.memory_space<vmem>>, %arg8: memref<1x1x32xf32, #tpu.memory_space<vmem>>, %arg9: memref<1x1x32xf32, #tpu.memory_space<vmem>>, %arg10: memref<1x1x32xf32, #tpu.memory_space<vmem>>, %arg11: memref<1x32x128xbf16, #tpu.memory_space<vmem>>, %arg12: memref<1x1x128xf32, #tpu.memory_space<vmem>>, %arg13: memref<1x128x32xbf16, #tpu.memory_space<vmem>>, %arg14: memref<1x1x32xf32, #tpu.memory_space<vmem>>, %arg15: memref<1x32xf32, #tpu.memory_space<vmem>>, %arg16: memref<1x32xf32, #tpu.memory_space<vmem>>, %arg17: memref<32x128xbf16, #tpu.memory_space<vmem>>, %arg18: memref<1x8x128xf32, #tpu.memory_space<vmem>>, %arg19: memref<8x32xf32, #tpu.memory_space<vmem>>) attributes {dimension_semantics = [#tpu.dimension_semantics<parallel>, #tpu.dimension_semantics<arbitrary>], iteration_bounds = array<i64: 2, 2>, scalar_prefetch = 0 : i64, scratch_operands = 1 : i64, tpu.core_type = #tpu.core_type<tc>, window_params = [{transform_indices = @transform_0, window_bounds = array<i64: 1, 8, 32>}, {transform_indices = @transform_1, window_bounds = array<i64: 1, 1, 32>}, {transform_indices = @transform_2, window_bounds = array<i64: 1, 1, 32>}, {transform_indices = @transform_3, window_bounds = array<i64: 1, 12, 32, 8>}, {transform_indices = @transform_4, window_bounds = array<i64: 1, 12, 1, 8>}, {transform_indices = @transform_5, window_bounds = array<i64: 1, 4, 8, 32>}, {transform_indices = @transform_6, window_bounds = array<i64: 1, 1, 32>}, {transform_indices = @transform_7, window_bounds = array<i64: 1, 1, 32>}, {transform_indices = @transform_8, window_bounds = array<i64: 1, 1, 32>}, {transform_indices = @transform_9, window_bounds = array<i64: 1, 32, 128>}, {transform_indices = @transform_10, window_bounds = array<i64: 1, 1, 128>}, {transform_indices = @transform_11, window_bounds = array<i64: 1, 128, 32>}, {transform_indices = @transform_12, window_bounds = array<i64: 1, 1, 32>}, {pipeline_mode = #tpu.pipeline_mode<synchronous>, transform_indices = @transform_13, window_bounds = array<i64: 1, 32>}, {pipeline_mode = #tpu.pipeline_mode<synchronous>, transform_indices = @transform_14, window_bounds = array<i64: 1, 32>}, {pipeline_mode = #tpu.pipeline_mode<synchronous>, transform_indices = @transform_15, window_bounds = array<i64: 32, 128>}, {transform_indices = @transform_16, window_bounds = array<i64: 1, 8, 128>}]} {
    %c0_i32 = arith.constant 0 : i32
    %0 = arith.cmpi eq, %arg1, %c0_i32 : i32
    %1 = arith.extui %0 : i1 to i32
    %c0_i32_0 = arith.constant 0 : i32
    %2 = arith.cmpi ne, %1, %c0_i32_0 : i32
    scf.if %2 {
      %c0_66 = arith.constant 0 : index
      %c0_67 = arith.constant 0 : index
      %c0_68 = arith.constant 0 : index
      %132 = vector.load %arg2[%c0_66, %c0_67, %c0_68] : memref<1x8x32xf32, #tpu.memory_space<vmem>>, vector<1x8x32xf32>
      %133 = vector.shape_cast %132 : vector<1x8x32xf32> to vector<8x32xf32>
      %c0_69 = arith.constant 0 : index
      %c0_70 = arith.constant 0 : index
      %134 = vector.load %arg19[%c0_69, %c0_70] : memref<8x32xf32, #tpu.memory_space<vmem>>, vector<8x32xf32>
      tpu.vector_store %arg19[%c0_69, %c0_70], %133 {strides = array<i32>} : memref<8x32xf32, #tpu.memory_space<vmem>>, vector<8x32xf32>,
    } else {
    }
    %c0 = arith.constant 0 : index
    %c0_1 = arith.constant 0 : index
    %3 = vector.load %arg19[%c0, %c0_1] : memref<8x32xf32, #tpu.memory_space<vmem>>, vector<8x32xf32>
    %4 = tpu.iota {dimensions = array<i32: 0>} : vector<8x8xi32>
    %5 = tpu.iota {dimensions = array<i32: 1>} : vector<8x8xi32>
    %6 = arith.cmpi sle, %5, %4 : vector<8x8xi32>
    %7 = vector.shape_cast %6 : vector<8x8xi1> to vector<1x8x8xi1>
    %c0_2 = arith.constant 0 : index
    %c0_3 = arith.constant 0 : index
    %c0_4 = arith.constant 0 : index
    %8 = vector.load %arg3[%c0_2, %c0_3, %c0_4] : memref<1x1x32xf32, #tpu.memory_space<vmem>>, vector<1x1x32xf32>
    %9 = vector.shape_cast %8 : vector<1x1x32xf32> to vector<1x32xf32>
    %c0_5 = arith.constant 0 : index
    %c0_6 = arith.constant 0 : index
    %c0_7 = arith.constant 0 : index
    %10 = vector.load %arg4[%c0_5, %c0_6, %c0_7] : memref<1x1x32xf32, #tpu.memory_space<vmem>>, vector<1x1x32xf32>
    %11 = vector.shape_cast %10 : vector<1x1x32xf32> to vector<1x32xf32>
    %cst = arith.constant dense<0.000000e+00> : vector<8xf32>
    %12 = vector.multi_reduction <add>, %3, %cst [1] : vector<8x32xf32> to vector<8xf32>
    %13 = vector.shape_cast %12 : vector<8xf32> to vector<8x1xf32>
    %cst_8 = arith.constant 3.200000e+01 : f32
    %14 = vector.broadcast %cst_8 : f32 to vector<8x1xf32>
    %15 = arith.divf %13, %14 : vector<8x1xf32>
    %16 = vector.broadcast %15 : vector<8x1xf32> to vector<8x32xf32>
    %17 = arith.subf %3, %16 : vector<8x32xf32>
    %18 = arith.mulf %17, %17 : vector<8x32xf32>
    %cst_9 = arith.constant dense<0.000000e+00> : vector<8xf32>
    %19 = vector.multi_reduction <add>, %18, %cst_9 [1] : vector<8x32xf32> to vector<8xf32>
    %20 = vector.shape_cast %19 : vector<8xf32> to vector<8x1xf32>
    %cst_10 = arith.constant 3.200000e+01 : f32
    %21 = vector.broadcast %cst_10 : f32 to vector<8x1xf32>
    %22 = arith.divf %20, %21 : vector<8x1xf32>
    %23 = vector.broadcast %15 : vector<8x1xf32> to vector<8x32xf32>
    %24 = arith.subf %3, %23 : vector<8x32xf32>
    %cst_11 = arith.constant 9.99999974E-6 : f32
    %25 = vector.broadcast %cst_11 : f32 to vector<8x1xf32>
    %26 = arith.addf %22, %25 : vector<8x1xf32>
    %27 = math.rsqrt %26 : vector<8x1xf32>
    %28 = vector.broadcast %27 : vector<8x1xf32> to vector<8x32xf32>
    %29 = arith.mulf %24, %28 : vector<8x32xf32>
    %30 = vector.broadcast %9 : vector<1x32xf32> to vector<8x32xf32>
    %31 = arith.mulf %29, %30 : vector<8x32xf32>
    %32 = vector.broadcast %11 : vector<1x32xf32> to vector<8x32xf32>
    %33 = arith.addf %31, %32 : vector<8x32xf32>
    %34 = arith.truncf %33 : vector<8x32xf32> to vector<8x32xbf16>
    %35 = vector.shape_cast %34 : vector<8x32xbf16> to vector<1x8x32xbf16>
    %36 = vector.shape_cast %35 : vector<1x8x32xbf16> to vector<1x8x32xbf16>
    %37 = vector.broadcast %36 : vector<1x8x32xbf16> to vector<12x8x32xbf16>
    %c0_12 = arith.constant 0 : index
    %c0_13 = arith.constant 0 : index
    %c0_14 = arith.constant 0 : index
    %c0_15 = arith.constant 0 : index
    %38 = vector.load %arg5[%c0_12, %c0_13, %c0_14, %c0_15] : memref<1x12x32x8xbf16, #tpu.memory_space<vmem>>, vector<1x12x32x8xbf16>
    %39 = vector.shape_cast %38 : vector<1x12x32x8xbf16> to vector<12x32x8xbf16>
    "tpu.trace_start"() <{level = 10 : i32, message = "htc,hcd->htd"}> : () -> ()
    %cst_16 = arith.constant dense<0.000000e+00> : vector<12x8x8xf32>
    %40 = tpu.matmul %37, %39, %cst_16 {dimension_numbers = #tpu.dot_dimension_numbers<[2], [1], [1], [2], [0, 0, 0, 1, 1, 2], [0], [0]>} : vector<12x8x32xbf16>, vector<12x32x8xbf16>, vector<12x8x8xf32> -> vector<12x8x8xf32>
    "tpu.trace_stop"() : () -> ()
    %c0_17 = arith.constant 0 : index
    %c0_18 = arith.constant 0 : index
    %c0_19 = arith.constant 0 : index
    %c0_20 = arith.constant 0 : index
    %41 = vector.load %arg6[%c0_17, %c0_18, %c0_19, %c0_20] : memref<1x12x1x8xf32, #tpu.memory_space<vmem>>, vector<1x12x1x8xf32>
    %42 = vector.shape_cast %41 : vector<1x12x1x8xf32> to vector<12x1x8xf32>
    %43 = vector.broadcast %42 : vector<12x1x8xf32> to vector<12x8x8xf32>
    %44 = arith.addf %40, %43 : vector<12x8x8xf32>
    %45 = vector.extract_strided_slice %44 {offsets = [0, 0, 0], sizes = [4, 8, 8], strides = [1, 1, 1]} : vector<12x8x8xf32> to vector<4x8x8xf32>
    %46 = vector.extract_strided_slice %44 {offsets = [4, 0, 0], sizes = [4, 8, 8], strides = [1, 1, 1]} : vector<12x8x8xf32> to vector<4x8x8xf32>
    %47 = vector.extract_strided_slice %44 {offsets = [8, 0, 0], sizes = [4, 8, 8], strides = [1, 1, 1]} : vector<12x8x8xf32> to vector<4x8x8xf32>
    %48 = arith.truncf %45 : vector<4x8x8xf32> to vector<4x8x8xbf16>
    %49 = arith.truncf %46 : vector<4x8x8xf32> to vector<4x8x8xbf16>
    "tpu.trace_start"() <{level = 10 : i32, message = "hqd,hkd->hqk"}> : () -> ()
    %cst_21 = arith.constant dense<0.000000e+00> : vector<4x8x8xf32>
    %50 = tpu.matmul %48, %49, %cst_21 {dimension_numbers = #tpu.dot_dimension_numbers<[2], [2], [1], [1], [0, 0, 0, 1, 1, 1], [0], [0]>} : vector<4x8x8xbf16>, vector<4x8x8xbf16>, vector<4x8x8xf32> -> vector<4x8x8xf32>
    %cst_22 = arith.constant -1.000000e+30 : f32
    "tpu.trace_stop"() : () -> ()
    %51 = vector.shape_cast %7 : vector<1x8x8xi1> to vector<1x8x8xi1>
    %52 = vector.broadcast %51 : vector<1x8x8xi1> to vector<4x8x8xi1>
    %53 = vector.broadcast %cst_22 : f32 to vector<4x8x8xf32>
    %54 = arith.select %52, %50, %53 : vector<4x8x8xi1>, vector<4x8x8xf32>
    %cst_23 = arith.constant dense<0xFF800000> : vector<4x8xf32>
    %55 = vector.multi_reduction <maximumf>, %54, %cst_23 [2] : vector<4x8x8xf32> to vector<4x8xf32>
    %56 = vector.shape_cast %55 : vector<4x8xf32> to vector<4x8x1xf32>
    %57 = vector.broadcast %56 : vector<4x8x1xf32> to vector<4x8x8xf32>
    %58 = arith.subf %54, %57 : vector<4x8x8xf32>
    %59 = math.exp %58 : vector<4x8x8xf32>
    %cst_24 = arith.constant dense<0.000000e+00> : vector<4x8xf32>
    %60 = vector.multi_reduction <add>, %59, %cst_24 [2] : vector<4x8x8xf32> to vector<4x8xf32>
    %61 = vector.shape_cast %60 : vector<4x8xf32> to vector<4x8x1xf32>
    %62 = vector.broadcast %61 : vector<4x8x1xf32> to vector<4x8x8xf32>
    %63 = arith.divf %59, %62 : vector<4x8x8xf32>
    %64 = arith.truncf %63 : vector<4x8x8xf32> to vector<4x8x8xbf16>
    %65 = arith.truncf %47 : vector<4x8x8xf32> to vector<4x8x8xbf16>
    "tpu.trace_start"() <{level = 10 : i32, message = "hqk,hkd->hqd"}> : () -> ()
    %cst_25 = arith.constant dense<0.000000e+00> : vector<4x8x8xf32>
    %66 = tpu.matmul %64, %65, %cst_25 {dimension_numbers = #tpu.dot_dimension_numbers<[2], [1], [1], [2], [0, 0, 0, 1, 1, 2], [0], [0]>} : vector<4x8x8xbf16>, vector<4x8x8xbf16>, vector<4x8x8xf32> -> vector<4x8x8xf32>
    "tpu.trace_stop"() : () -> ()
    %67 = arith.truncf %66 : vector<4x8x8xf32> to vector<4x8x8xbf16>
    %c0_26 = arith.constant 0 : index
    %c0_27 = arith.constant 0 : index
    %c0_28 = arith.constant 0 : index
    %c0_29 = arith.constant 0 : index
    %68 = vector.load %arg7[%c0_26, %c0_27, %c0_28, %c0_29] : memref<1x4x8x32xbf16, #tpu.memory_space<vmem>>, vector<1x4x8x32xbf16>
    %69 = vector.shape_cast %68 : vector<1x4x8x32xbf16> to vector<4x8x32xbf16>
    "tpu.trace_start"() <{level = 10 : i32, message = "hqd,hdc->hqc"}> : () -> ()
    %cst_30 = arith.constant dense<0.000000e+00> : vector<4x8x32xf32>
    %70 = tpu.matmul %67, %69, %cst_30 {dimension_numbers = #tpu.dot_dimension_numbers<[2], [1], [1], [2], [0, 0, 0, 1, 1, 2], [0], [0]>} : vector<4x8x8xbf16>, vector<4x8x32xbf16>, vector<4x8x32xf32> -> vector<4x8x32xf32>
    "tpu.trace_stop"() : () -> ()
    %cst_31 = arith.constant dense<0.000000e+00> : vector<8x32xf32>
    %71 = vector.multi_reduction <add>, %70, %cst_31 [0] : vector<4x8x32xf32> to vector<8x32xf32>
    %72 = arith.addf %3, %71 : vector<8x32xf32>
    %c0_32 = arith.constant 0 : index
    %c0_33 = arith.constant 0 : index
    %c0_34 = arith.constant 0 : index
    %73 = vector.load %arg8[%c0_32, %c0_33, %c0_34] : memref<1x1x32xf32, #tpu.memory_space<vmem>>, vector<1x1x32xf32>
    %74 = vector.shape_cast %73 : vector<1x1x32xf32> to vector<1x32xf32>
    %75 = vector.broadcast %74 : vector<1x32xf32> to vector<8x32xf32>
    %76 = arith.addf %72, %75 : vector<8x32xf32>
    %c0_35 = arith.constant 0 : index
    %c0_36 = arith.constant 0 : index
    %c0_37 = arith.constant 0 : index
    %77 = vector.load %arg9[%c0_35, %c0_36, %c0_37] : memref<1x1x32xf32, #tpu.memory_space<vmem>>, vector<1x1x32xf32>
    %78 = vector.shape_cast %77 : vector<1x1x32xf32> to vector<1x32xf32>
    %c0_38 = arith.constant 0 : index
    %c0_39 = arith.constant 0 : index
    %c0_40 = arith.constant 0 : index
    %79 = vector.load %arg10[%c0_38, %c0_39, %c0_40] : memref<1x1x32xf32, #tpu.memory_space<vmem>>, vector<1x1x32xf32>
    %80 = vector.shape_cast %79 : vector<1x1x32xf32> to vector<1x32xf32>
    %cst_41 = arith.constant dense<0.000000e+00> : vector<8xf32>
    %81 = vector.multi_reduction <add>, %76, %cst_41 [1] : vector<8x32xf32> to vector<8xf32>
    %82 = vector.shape_cast %81 : vector<8xf32> to vector<8x1xf32>
    %cst_42 = arith.constant 3.200000e+01 : f32
    %83 = vector.broadcast %cst_42 : f32 to vector<8x1xf32>
    %84 = arith.divf %82, %83 : vector<8x1xf32>
    %85 = vector.broadcast %84 : vector<8x1xf32> to vector<8x32xf32>
    %86 = arith.subf %76, %85 : vector<8x32xf32>
    %87 = arith.mulf %86, %86 : vector<8x32xf32>
    %cst_43 = arith.constant dense<0.000000e+00> : vector<8xf32>
    %88 = vector.multi_reduction <add>, %87, %cst_43 [1] : vector<8x32xf32> to vector<8xf32>
    %89 = vector.shape_cast %88 : vector<8xf32> to vector<8x1xf32>
    %cst_44 = arith.constant 3.200000e+01 : f32
    %90 = vector.broadcast %cst_44 : f32 to vector<8x1xf32>
    %91 = arith.divf %89, %90 : vector<8x1xf32>
    %92 = vector.broadcast %84 : vector<8x1xf32> to vector<8x32xf32>
    %93 = arith.subf %76, %92 : vector<8x32xf32>
    %cst_45 = arith.constant 9.99999974E-6 : f32
    %94 = vector.broadcast %cst_45 : f32 to vector<8x1xf32>
    %95 = arith.addf %91, %94 : vector<8x1xf32>
    %96 = math.rsqrt %95 : vector<8x1xf32>
    %97 = vector.broadcast %96 : vector<8x1xf32> to vector<8x32xf32>
    %98 = arith.mulf %93, %97 : vector<8x32xf32>
    %99 = vector.broadcast %78 : vector<1x32xf32> to vector<8x32xf32>
    %100 = arith.mulf %98, %99 : vector<8x32xf32>
    %101 = vector.broadcast %80 : vector<1x32xf32> to vector<8x32xf32>
    %102 = arith.addf %100, %101 : vector<8x32xf32>
    %103 = arith.truncf %102 : vector<8x32xf32> to vector<8x32xbf16>
    %c0_46 = arith.constant 0 : index
    %c0_47 = arith.constant 0 : index
    %c0_48 = arith.constant 0 : index
    %104 = vector.load %arg11[%c0_46, %c0_47, %c0_48] : memref<1x32x128xbf16, #tpu.memory_space<vmem>>, vector<1x32x128xbf16>
    %105 = vector.shape_cast %104 : vector<1x32x128xbf16> to vector<32x128xbf16>
    %cst_49 = arith.constant dense<0.000000e+00> : vector<8x128xf32>
    %106 = tpu.matmul %103, %105, %cst_49 {dimension_numbers = #tpu.dot_dimension_numbers<[1], [0], [0], [1], [0, 0, 1, 1], [], []>} : vector<8x32xbf16>, vector<32x128xbf16>, vector<8x128xf32> -> vector<8x128xf32>
    %c0_50 = arith.constant 0 : index
    %c0_51 = arith.constant 0 : index
    %c0_52 = arith.constant 0 : index
    %107 = vector.load %arg12[%c0_50, %c0_51, %c0_52] : memref<1x1x128xf32, #tpu.memory_space<vmem>>, vector<1x1x128xf32>
    %108 = vector.shape_cast %107 : vector<1x1x128xf32> to vector<1x128xf32>
    %109 = vector.broadcast %108 : vector<1x128xf32> to vector<8x128xf32>
    %110 = arith.addf %106, %109 : vector<8x128xf32>
    %cst_53 = arith.constant 5.000000e-01 : f32
    %111 = vector.broadcast %cst_53 : f32 to vector<8x128xf32>
    %112 = arith.mulf %111, %110 : vector<8x128xf32>
    %cst_54 = arith.constant 0.707106769 : f32
    %113 = vector.broadcast %cst_54 : f32 to vector<8x128xf32>
    %114 = arith.mulf %110, %113 : vector<8x128xf32>
    %115 = math.erf %114 : vector<8x128xf32>
    %cst_55 = arith.constant 1.000000e+00 : f32
    %116 = vector.broadcast %cst_55 : f32 to vector<8x128xf32>
    %117 = arith.addf %116, %115 : vector<8x128xf32>
    %118 = arith.mulf %112, %117 : vector<8x128xf32>
    %119 = arith.truncf %118 : vector<8x128xf32> to vector<8x128xbf16>
    %c0_56 = arith.constant 0 : index
    %c0_57 = arith.constant 0 : index
    %c0_58 = arith.constant 0 : index
    %120 = vector.load %arg13[%c0_56, %c0_57, %c0_58] : memref<1x128x32xbf16, #tpu.memory_space<vmem>>, vector<1x128x32xbf16>
    %121 = vector.shape_cast %120 : vector<1x128x32xbf16> to vector<128x32xbf16>
    %cst_59 = arith.constant dense<0.000000e+00> : vector<8x32xf32>
    %122 = tpu.matmul %119, %121, %cst_59 {dimension_numbers = #tpu.dot_dimension_numbers<[1], [0], [0], [1], [0, 0, 1, 1], [], []>} : vector<8x128xbf16>, vector<128x32xbf16>, vector<8x32xf32> -> vector<8x32xf32>
    %c0_60 = arith.constant 0 : index
    %c0_61 = arith.constant 0 : index
    %c0_62 = arith.constant 0 : index
    %123 = vector.load %arg14[%c0_60, %c0_61, %c0_62] : memref<1x1x32xf32, #tpu.memory_space<vmem>>, vector<1x1x32xf32>
    %124 = vector.shape_cast %123 : vector<1x1x32xf32> to vector<1x32xf32>
    %125 = vector.broadcast %124 : vector<1x32xf32> to vector<8x32xf32>
    %126 = arith.addf %122, %125 : vector<8x32xf32>
    %127 = arith.addf %76, %126 : vector<8x32xf32>
    %c0_63 = arith.constant 0 : index
    %c0_64 = arith.constant 0 : index
    %128 = vector.load %arg19[%c0_63, %c0_64] : memref<8x32xf32, #tpu.memory_space<vmem>>, vector<8x32xf32>
    tpu.vector_store %arg19[%c0_63, %c0_64], %127 {strides = array<i32>} : memref<8x32xf32, #tpu.memory_space<vmem>>, vector<8x32xf32>,
    %c1_i32 = arith.constant 1 : i32
    %129 = arith.cmpi eq, %arg1, %c1_i32 : i32
    %130 = arith.extui %129 : i1 to i32
    %c0_i32_65 = arith.constant 0 : i32
    %131 = arith.cmpi ne, %130, %c0_i32_65 : i32
    scf.if %131 {
      %132 = vector.extract_strided_slice %127 {offsets = [7, 0], sizes = [1, 32], strides = [1, 1]} : vector<8x32xf32> to vector<1x32xf32>
      %c0_66 = arith.constant 0 : index
      %c0_67 = arith.constant 0 : index
      %133 = vector.load %arg15[%c0_66, %c0_67] : memref<1x32xf32, #tpu.memory_space<vmem>>, vector<1x32xf32>
      %c0_68 = arith.constant 0 : index
      %c0_69 = arith.constant 0 : index
      %134 = vector.load %arg16[%c0_68, %c0_69] : memref<1x32xf32, #tpu.memory_space<vmem>>, vector<1x32xf32>
      %cst_70 = arith.constant dense<0.000000e+00> : vector<1xf32>
      %135 = vector.multi_reduction <add>, %132, %cst_70 [1] : vector<1x32xf32> to vector<1xf32>
      %136 = vector.shape_cast %135 : vector<1xf32> to vector<1x1xf32>
      %cst_71 = arith.constant 3.200000e+01 : f32
      %137 = vector.broadcast %cst_71 : f32 to vector<1x1xf32>
      %138 = arith.divf %136, %137 : vector<1x1xf32>
      %139 = vector.broadcast %138 : vector<1x1xf32> to vector<1x32xf32>
      %140 = arith.subf %132, %139 : vector<1x32xf32>
      %141 = arith.mulf %140, %140 : vector<1x32xf32>
      %cst_72 = arith.constant dense<0.000000e+00> : vector<1xf32>
      %142 = vector.multi_reduction <add>, %141, %cst_72 [1] : vector<1x32xf32> to vector<1xf32>
      %143 = vector.shape_cast %142 : vector<1xf32> to vector<1x1xf32>
      %cst_73 = arith.constant 3.200000e+01 : f32
      %144 = vector.broadcast %cst_73 : f32 to vector<1x1xf32>
      %145 = arith.divf %143, %144 : vector<1x1xf32>
      %146 = vector.broadcast %138 : vector<1x1xf32> to vector<1x32xf32>
      %147 = arith.subf %132, %146 : vector<1x32xf32>
      %cst_74 = arith.constant 9.99999974E-6 : f32
      %148 = vector.broadcast %cst_74 : f32 to vector<1x1xf32>
      %149 = arith.addf %145, %148 : vector<1x1xf32>
      %150 = math.rsqrt %149 : vector<1x1xf32>
      %151 = vector.broadcast %150 : vector<1x1xf32> to vector<1x32xf32>
      %152 = arith.mulf %147, %151 : vector<1x32xf32>
      %153 = arith.mulf %152, %133 : vector<1x32xf32>
      %154 = arith.addf %153, %134 : vector<1x32xf32>
      %155 = arith.truncf %154 : vector<1x32xf32> to vector<1x32xbf16>
      %c0_75 = arith.constant 0 : index
      %c0_76 = arith.constant 0 : index
      %156 = vector.load %arg17[%c0_75, %c0_76] : memref<32x128xbf16, #tpu.memory_space<vmem>>, vector<32x128xbf16>
      %cst_77 = arith.constant dense<0.000000e+00> : vector<1x128xf32>
      %157 = tpu.matmul %155, %156, %cst_77 {dimension_numbers = #tpu.dot_dimension_numbers<[1], [0], [0], [1], [0, 0, 1, 1], [], []>} : vector<1x32xbf16>, vector<32x128xbf16>, vector<1x128xf32> -> vector<1x128xf32>
      %158 = vector.shape_cast %157 : vector<1x128xf32> to vector<1x128xf32>
      %159 = vector.broadcast %158 : vector<1x128xf32> to vector<8x128xf32>
      %c0_78 = arith.constant 0 : index
      %c0_79 = arith.constant 0 : index
      %c0_80 = arith.constant 0 : index
      %160 = vector.load %arg18[%c0_78, %c0_79, %c0_80] : memref<1x8x128xf32, #tpu.memory_space<vmem>>, vector<1x8x128xf32>
      %161 = vector.shape_cast %160 : vector<1x8x128xf32> to vector<8x128xf32>
      %162 = vector.shape_cast %159 : vector<8x128xf32> to vector<1x8x128xf32>
      tpu.vector_store %arg18[%c0_78, %c0_79, %c0_80], %162 {strides = array<i32>} : memref<1x8x128xf32, #tpu.memory_space<vmem>>, vector<1x8x128xf32>,
    } else {
    }
    return
  }
  func.func @transform_0(%arg0: i32, %arg1: i32) -> (i32, i32, i32) {
    %c0_i32 = arith.constant 0 : i32
    %c0_i32_0 = arith.constant 0 : i32
    %c0_i32_1 = arith.constant 0 : i32
    return %arg0, %c0_i32, %c0_i32_0 : i32, i32, i32
  }
  func.func @transform_1(%arg0: i32, %arg1: i32) -> (i32, i32, i32) {
    %c0_i32 = arith.constant 0 : i32
    %c0_i32_0 = arith.constant 0 : i32
    %c0_i32_1 = arith.constant 0 : i32
    return %arg1, %c0_i32, %c0_i32_0 : i32, i32, i32
  }
  func.func @transform_2(%arg0: i32, %arg1: i32) -> (i32, i32, i32) {
    %c0_i32 = arith.constant 0 : i32
    %c0_i32_0 = arith.constant 0 : i32
    %c0_i32_1 = arith.constant 0 : i32
    return %arg1, %c0_i32, %c0_i32_0 : i32, i32, i32
  }
  func.func @transform_3(%arg0: i32, %arg1: i32) -> (i32, i32, i32, i32) {
    %c0_i32 = arith.constant 0 : i32
    %c0_i32_0 = arith.constant 0 : i32
    %c0_i32_1 = arith.constant 0 : i32
    %c0_i32_2 = arith.constant 0 : i32
    return %arg1, %c0_i32, %c0_i32_0, %c0_i32_1 : i32, i32, i32, i32
  }
  func.func @transform_4(%arg0: i32, %arg1: i32) -> (i32, i32, i32, i32) {
    %c0_i32 = arith.constant 0 : i32
    %c0_i32_0 = arith.constant 0 : i32
    %c0_i32_1 = arith.constant 0 : i32
    %c0_i32_2 = arith.constant 0 : i32
    return %arg1, %c0_i32, %c0_i32_0, %c0_i32_1 : i32, i32, i32, i32
  }
  func.func @transform_5(%arg0: i32, %arg1: i32) -> (i32, i32, i32, i32) {
    %c0_i32 = arith.constant 0 : i32
    %c0_i32_0 = arith.constant 0 : i32
    %c0_i32_1 = arith.constant 0 : i32
    %c0_i32_2 = arith.constant 0 : i32
    return %arg1, %c0_i32, %c0_i32_0, %c0_i32_1 : i32, i32, i32, i32
  }
  func.func @transform_6(%arg0: i32, %arg1: i32) -> (i32, i32, i32) {
    %c0_i32 = arith.constant 0 : i32
    %c0_i32_0 = arith.constant 0 : i32
    %c0_i32_1 = arith.constant 0 : i32
    return %arg1, %c0_i32, %c0_i32_0 : i32, i32, i32
  }
  func.func @transform_7(%arg0: i32, %arg1: i32) -> (i32, i32, i32) {
    %c0_i32 = arith.constant 0 : i32
    %c0_i32_0 = arith.constant 0 : i32
    %c0_i32_1 = arith.constant 0 : i32
    return %arg1, %c0_i32, %c0_i32_0 : i32, i32, i32
  }
  func.func @transform_8(%arg0: i32, %arg1: i32) -> (i32, i32, i32) {
    %c0_i32 = arith.constant 0 : i32
    %c0_i32_0 = arith.constant 0 : i32
    %c0_i32_1 = arith.constant 0 : i32
    return %arg1, %c0_i32, %c0_i32_0 : i32, i32, i32
  }
  func.func @transform_9(%arg0: i32, %arg1: i32) -> (i32, i32, i32) {
    %c0_i32 = arith.constant 0 : i32
    %c0_i32_0 = arith.constant 0 : i32
    %c0_i32_1 = arith.constant 0 : i32
    return %arg1, %c0_i32, %c0_i32_0 : i32, i32, i32
  }
  func.func @transform_10(%arg0: i32, %arg1: i32) -> (i32, i32, i32) {
    %c0_i32 = arith.constant 0 : i32
    %c0_i32_0 = arith.constant 0 : i32
    %c0_i32_1 = arith.constant 0 : i32
    return %arg1, %c0_i32, %c0_i32_0 : i32, i32, i32
  }
  func.func @transform_11(%arg0: i32, %arg1: i32) -> (i32, i32, i32) {
    %c0_i32 = arith.constant 0 : i32
    %c0_i32_0 = arith.constant 0 : i32
    %c0_i32_1 = arith.constant 0 : i32
    return %arg1, %c0_i32, %c0_i32_0 : i32, i32, i32
  }
  func.func @transform_12(%arg0: i32, %arg1: i32) -> (i32, i32, i32) {
    %c0_i32 = arith.constant 0 : i32
    %c0_i32_0 = arith.constant 0 : i32
    %c0_i32_1 = arith.constant 0 : i32
    return %arg1, %c0_i32, %c0_i32_0 : i32, i32, i32
  }
  func.func @transform_13(%arg0: i32, %arg1: i32) -> (i32, i32) {
    %c0_i32 = arith.constant 0 : i32
    %c0_i32_0 = arith.constant 0 : i32
    %c0_i32_1 = arith.constant 0 : i32
    return %c0_i32, %c0_i32_0 : i32, i32
  }
  func.func @transform_14(%arg0: i32, %arg1: i32) -> (i32, i32) {
    %c0_i32 = arith.constant 0 : i32
    %c0_i32_0 = arith.constant 0 : i32
    %c0_i32_1 = arith.constant 0 : i32
    return %c0_i32, %c0_i32_0 : i32, i32
  }
  func.func @transform_15(%arg0: i32, %arg1: i32) -> (i32, i32) {
    %c0_i32 = arith.constant 0 : i32
    %c0_i32_0 = arith.constant 0 : i32
    %c0_i32_1 = arith.constant 0 : i32
    return %c0_i32, %c0_i32_0 : i32, i32
  }
  func.func @transform_16(%arg0: i32, %arg1: i32) -> (i32, i32, i32) {
    %c0_i32 = arith.constant 0 : i32
    %c0_i32_0 = arith.constant 0 : i32
    %c0_i32_1 = arith.constant 0 : i32
    return %arg0, %c0_i32, %c0_i32_0 : i32, i32, i32
  }
}

</mosaic_0001>

<llo_original>
// kernel: tpu_custom_call.1
$region0: #{tpu_custom_call.1}
  #allocation0 [shape = 'u32[]', space=smem, size = 0x4, offset = 0x4, fixed_abs, tag = 'smem constant byte address 0x4 - core index']
  #allocation1 [shape = 'u32[144,128]{1,0:T(1,128)}', space=vmem, size = 0x12000, scoped, tag = 'internal scratch']
  #allocation2 [shape = 'f32[8,32]{1,0:T(8,128)}', space=vmem, size = 0x1000, scoped, tag = 'scratch operand']
  %s0 = inlined_call_operand.vmem [shape: f32[2,8,32], index: 0, kind: input, shape index: {}]
  %s1 = inlined_call_operand.vmem [shape: f32[2,1,32], index: 1, kind: input, shape index: {}]
  %s2 = inlined_call_operand.vmem [shape: f32[2,1,32], index: 2, kind: input, shape index: {}]
  %s3 = inlined_call_operand.vmem [shape: bf16[2,12,32,8], index: 3, kind: input, shape index: {}]
  %s4 = inlined_call_operand.vmem [shape: f32[2,12,1,8], index: 4, kind: input, shape index: {}]
  %s5 = inlined_call_operand.vmem [shape: bf16[2,4,8,32], index: 5, kind: input, shape index: {}]
  %s6 = inlined_call_operand.vmem [shape: f32[2,1,32], index: 6, kind: input, shape index: {}]
  %s7 = inlined_call_operand.vmem [shape: f32[2,1,32], index: 7, kind: input, shape index: {}]
  %s8 = inlined_call_operand.vmem [shape: f32[2,1,32], index: 8, kind: input, shape index: {}]
  %s9 = inlined_call_operand.vmem [shape: bf16[2,32,128], index: 9, kind: input, shape index: {}]
  %s10 = inlined_call_operand.vmem [shape: f32[2,1,128], index: 10, kind: input, shape index: {}]
  %s11 = inlined_call_operand.vmem [shape: bf16[2,128,32], index: 11, kind: input, shape index: {}]
  %s12 = inlined_call_operand.vmem [shape: f32[2,1,32], index: 12, kind: input, shape index: {}]
  %s13 = inlined_call_operand.vmem [shape: f32[1,32], index: 13, kind: input, shape index: {}]
  %s14 = inlined_call_operand.vmem [shape: f32[1,32], index: 14, kind: input, shape index: {}]
  %s15 = inlined_call_operand.vmem [shape: bf16[32,128], index: 15, kind: input, shape index: {}]
  %s16 = inlined_call_operand.hbm [shape: f32[2,8,128], index: 16, kind: output, shape index: {}]
  %s17 = sld [smem:[#allocation0]]
  $region105: #{tpu_custom_call.1} parent=0
    _
  %s19 = ssub.s32 1, %s17
  %s20 = scalar_select 0, %s19, %s17
  $region1: #{tpu_custom_call.1} parent=0
    #allocation3 [shape = 'u8[8192]{0}', space=vmem, size = 0x2000, scoped, tag = 'output window, operand 0']
    #allocation4 [shape = 's32[2]{0}', space=sflag, size = 0x8, scoped, tag = 'scoped memory for tpu_custom_call.1']
    %21 = vsyncpa [#allocation4], 0
    %s22 = scalar_lea.sflag [#allocation4], 1
    %23 = vsyncpa %s22, 0
    loop: start=0, step=1, limit=6
    $region2: #{tpu_custom_call.1} parent=1 // loop_pre_header
      _
    $region3: #{tpu_custom_call.1} parent=1 // loop_header
      %s25 = sphi 0, %s29
      %p26 = scmp.ge.s32.totalorder %s25, 6
      %s32 = sphi 0, %s44
      %s33 = sphi 0, %s40
      %s34 = sphi 0, %s32
      %s35 = sphi 0, %s33
      %s36 = sphi 0, %s34
      %s37 = sphi 0, %s35
      %s47 = sphi 0, %s49
      %s50 = sphi 0, %s47
      %s51 = sphi 0, %s50
      %s67 = sphi 0, %s51
      %s73 = sphi 0, %s75
      %s76 = sphi 0, %s73
      %s77 = sphi 0, %s76
      %s93 = sphi 0, %s77
      %s99 = sphi 0, %s101
      %s102 = sphi 0, %s99
      %s103 = sphi 0, %s102
      %s119 = sphi 0, %s103
      %s125 = sphi 0, %s127
      %s128 = sphi 0, %s125
      %s129 = sphi 0, %s128
      %s145 = sphi 0, %s129
      %s151 = sphi 0, %s153
      %s154 = sphi 0, %s151
      %s155 = sphi 0, %s154
      %s171 = sphi 0, %s155
      %s177 = sphi 0, %s179
      %s180 = sphi 0, %s177
      %s181 = sphi 0, %s180
      %s197 = sphi 0, %s181
      %s203 = sphi 0, %s205
      %s206 = sphi 0, %s203
      %s207 = sphi 0, %s206
      %s223 = sphi 0, %s207
      %s229 = sphi 0, %s231
      %s232 = sphi 0, %s229
      %s233 = sphi 0, %s232
      %s249 = sphi 0, %s233
      %s255 = sphi 0, %s257
      %s258 = sphi 0, %s255
      %s259 = sphi 0, %s258
      %s275 = sphi 0, %s259
      %s281 = sphi 0, %s283
      %s284 = sphi 0, %s281
      %s285 = sphi 0, %s284
      %s301 = sphi 0, %s285
      %s307 = sphi 0, %s309
      %s310 = sphi 0, %s307
      %s311 = sphi 0, %s310
      %s327 = sphi 0, %s311
      %s333 = sphi 0, %s335
      %s336 = sphi 0, %s333
      %s337 = sphi 0, %s336
      %s353 = sphi 0, %s337
      %s359 = sphi 0, %s361
      %s362 = sphi 0, %s359
      %s363 = sphi 0, %s362
      %s379 = sphi 0, %s363
      %s383 = sphi 0, %s383
      %s385 = sphi 0, %s383
      %s386 = sphi 0, %s385
      %s400 = sphi 0, %s386
      %s404 = sphi 0, %s404
      %s406 = sphi 0, %s404
      %s407 = sphi 0, %s406
      %s421 = sphi 0, %s407
      %s425 = sphi 0, %s425
      %s427 = sphi 0, %s425
      %s428 = sphi 0, %s427
      %s442 = sphi 0, %s428
      %s448 = sphi 0, %s450
      %s451 = sphi 0, %s448
      %s452 = sphi 0, %s451
      %s468 = sphi 0, %s452
    $region4: #{tpu_custom_call.1} parent=1 // loop_header_branch
      %28 = sbr.rel (%p26) target = $region8
    $region5: #{tpu_custom_call.1} parent=1 // loop_body
      %s30 = ssub.s32 %s25, 1
      %s31 = ssub.s32 %s25, 2
      %s38 = sadd.s32 1, %s33
      %p39 = scmp.ge.s32.totalorder %s38, 2
      %s40 = scalar_select %p39, 0, %s38
      %s41 = sadd.s32 1, %s32
      %s42 = scalar_select %p39, %s41, %s32
      %p43 = scmp.ge.s32.totalorder %s42, 2
      %s44 = scalar_select %p43, 0, %s42
      %s45 = ssub.s32 %s32, %s44
      %p46 = scmp.eq.s32.totalorder %s45, 0
      %s48 = sadd.s32 %s47, 1
      %s49 = scalar_select %p46, %s47, %s48
      %p52 = pneg %p46
      %p53 = scmp.eq.s32.totalorder %s25, 3
      %p54 = por %p52, %p53
      %p55 = scmp.ne.s32.totalorder %s47, %s50
      %p56 = scmp.eq.s32.totalorder %s25, 0
      %p57 = por %p55, %p56
      %p58 = scmp.ne.s32.totalorder %s47, %s50
      %p59 = scmp.eq.s32.totalorder %s30, 3
      %p60 = por %p58, %p59
      %p61 = scmp.ne.s32.totalorder %s50, %s51
      %p62 = scmp.eq.s32.totalorder %s30, 0
      %p63 = por %p61, %p62
      %p64 = scmp.ne.s32.totalorder %s50, %s51
      %p65 = scmp.eq.s32.totalorder %s31, 3
      %p66 = por %p64, %p65
      %p68 = scmp.ne.s32.totalorder %s51, %s67
      %p69 = scmp.eq.s32.totalorder %s31, 0
      %p70 = por %p68, %p69
      %s71 = ssub.s32 %s33, %s40
      %p72 = scmp.eq.s32.totalorder %s71, 0
      %s74 = sadd.s32 %s73, 1
      %s75 = scalar_select %p72, %s73, %s74
      %p78 = pneg %p72
      %p79 = scmp.eq.s32.totalorder %s25, 3
      %p80 = por %p78, %p79
      %p81 = scmp.ne.s32.totalorder %s73, %s76
      %p82 = scmp.eq.s32.totalorder %s25, 0
      %p83 = por %p81, %p82
      %p84 = scmp.ne.s32.totalorder %s73, %s76
      %p85 = scmp.eq.s32.totalorder %s30, 3
      %p86 = por %p84, %p85
      %p87 = scmp.ne.s32.totalorder %s76, %s77
      %p88 = scmp.eq.s32.totalorder %s30, 0
      %p89 = por %p87, %p88
      %p90 = scmp.ne.s32.totalorder %s76, %s77
      %p91 = scmp.eq.s32.totalorder %s31, 3
      %p92 = por %p90, %p91
      %p94 = scmp.ne.s32.totalorder %s77, %s93
      %p95 = scmp.eq.s32.totalorder %s31, 0
      %p96 = por %p94, %p95
      %s97 = ssub.s32 %s33, %s40
      %p98 = scmp.eq.s32.totalorder %s97, 0
      %s100 = sadd.s32 %s99, 1
      %s101 = scalar_select %p98, %s99, %s100
      %p104 = pneg %p98
      %p105 = scmp.eq.s32.totalorder %s25, 3
      %p106 = por %p104, %p105
      %p107 = scmp.ne.s32.totalorder %s99, %s102
      %p108 = scmp.eq.s32.totalorder %s25, 0
      %p109 = por %p107, %p108
      %p110 = scmp.ne.s32.totalorder %s99, %s102
      %p111 = scmp.eq.s32.totalorder %s30, 3
      %p112 = por %p110, %p111
      %p113 = scmp.ne.s32.totalorder %s102, %s103
      %p114 = scmp.eq.s32.totalorder %s30, 0
      %p115 = por %p113, %p114
      %p116 = scmp.ne.s32.totalorder %s102, %s103
      %p117 = scmp.eq.s32.totalorder %s31, 3
      %p118 = por %p116, %p117
      %p120 = scmp.ne.s32.totalorder %s103, %s119
      %p121 = scmp.eq.s32.totalorder %s31, 0
      %p122 = por %p120, %p121
      %s123 = ssub.s32 %s33, %s40
      %p124 = scmp.eq.s32.totalorder %s123, 0
      %s126 = sadd.s32 %s125, 1
      %s127 = scalar_select %p124, %s125, %s126
      %p130 = pneg %p124
      %p131 = scmp.eq.s32.totalorder %s25, 3
      %p132 = por %p130, %p131
      %p133 = scmp.ne.s32.totalorder %s125, %s128
      %p134 = scmp.eq.s32.totalorder %s25, 0
      %p135 = por %p133, %p134
      %p136 = scmp.ne.s32.totalorder %s125, %s128
      %p137 = scmp.eq.s32.totalorder %s30, 3
      %p138 = por %p136, %p137
      %p139 = scmp.ne.s32.totalorder %s128, %s129
      %p140 = scmp.eq.s32.totalorder %s30, 0
      %p141 = por %p139, %p140
      %p142 = scmp.ne.s32.totalorder %s128, %s129
      %p143 = scmp.eq.s32.totalorder %s31, 3
      %p144 = por %p142, %p143
      %p146 = scmp.ne.s32.totalorder %s129, %s145
      %p147 = scmp.eq.s32.totalorder %s31, 0
      %p148 = por %p146, %p147
      %s149 = ssub.s32 %s33, %s40
      %p150 = scmp.eq.s32.totalorder %s149, 0
      %s152 = sadd.s32 %s151, 1
      %s153 = scalar_select %p150, %s151, %s152
      %p156 = pneg %p150
      %p157 = scmp.eq.s32.totalorder %s25, 3
      %p158 = por %p156, %p157
      %p159 = scmp.ne.s32.totalorder %s151, %s154
      %p160 = scmp.eq.s32.totalorder %s25, 0
      %p161 = por %p159, %p160
      %p162 = scmp.ne.s32.totalorder %s151, %s154
      %p163 = scmp.eq.s32.totalorder %s30, 3
      %p164 = por %p162, %p163
      %p165 = scmp.ne.s32.totalorder %s154, %s155
      %p166 = scmp.eq.s32.totalorder %s30, 0
      %p167 = por %p165, %p166
      %p168 = scmp.ne.s32.totalorder %s154, %s155
      %p169 = scmp.eq.s32.totalorder %s31, 3
      %p170 = por %p168, %p169
      %p172 = scmp.ne.s32.totalorder %s155, %s171
      %p173 = scmp.eq.s32.totalorder %s31, 0
      %p174 = por %p172, %p173
      %s175 = ssub.s32 %s33, %s40
      %p176 = scmp.eq.s32.totalorder %s175, 0
      %s178 = sadd.s32 %s177, 1
      %s179 = scalar_select %p176, %s177, %s178
      %p182 = pneg %p176
      %p183 = scmp.eq.s32.totalorder %s25, 3
      %p184 = por %p182, %p183
      %p185 = scmp.ne.s32.totalorder %s177, %s180
      %p186 = scmp.eq.s32.totalorder %s25, 0
      %p187 = por %p185, %p186
      %p188 = scmp.ne.s32.totalorder %s177, %s180
      %p189 = scmp.eq.s32.totalorder %s30, 3
      %p190 = por %p188, %p189
      %p191 = scmp.ne.s32.totalorder %s180, %s181
      %p192 = scmp.eq.s32.totalorder %s30, 0
      %p193 = por %p191, %p192
      %p194 = scmp.ne.s32.totalorder %s180, %s181
      %p195 = scmp.eq.s32.totalorder %s31, 3
      %p196 = por %p194, %p195
      %p198 = scmp.ne.s32.totalorder %s181, %s197
      %p199 = scmp.eq.s32.totalorder %s31, 0
      %p200 = por %p198, %p199
      %s201 = ssub.s32 %s33, %s40
      %p202 = scmp.eq.s32.totalorder %s201, 0
      %s204 = sadd.s32 %s203, 1
      %s205 = scalar_select %p202, %s203, %s204
      %p208 = pneg %p202
      %p209 = scmp.eq.s32.totalorder %s25, 3
      %p210 = por %p208, %p209
      %p211 = scmp.ne.s32.totalorder %s203, %s206
      %p212 = scmp.eq.s32.totalorder %s25, 0
      %p213 = por %p211, %p212
      %p214 = scmp.ne.s32.totalorder %s203, %s206
      %p215 = scmp.eq.s32.totalorder %s30, 3
      %p216 = por %p214, %p215
      %p217 = scmp.ne.s32.totalorder %s206, %s207
      %p218 = scmp.eq.s32.totalorder %s30, 0
      %p219 = por %p217, %p218
      %p220 = scmp.ne.s32.totalorder %s206, %s207
      %p221 = scmp.eq.s32.totalorder %s31, 3
      %p222 = por %p220, %p221
      %p224 = scmp.ne.s32.totalorder %s207, %s223
      %p225 = scmp.eq.s32.totalorder %s31, 0
      %p226 = por %p224, %p225
      %s227 = ssub.s32 %s33, %s40
      %p228 = scmp.eq.s32.totalorder %s227, 0
      %s230 = sadd.s32 %s229, 1
      %s231 = scalar_select %p228, %s229, %s230
      %p234 = pneg %p228
      %p235 = scmp.eq.s32.totalorder %s25, 3
      %p236 = por %p234, %p235
      %p237 = scmp.ne.s32.totalorder %s229, %s232
      %p238 = scmp.eq.s32.totalorder %s25, 0
      %p239 = por %p237, %p238
      %p240 = scmp.ne.s32.totalorder %s229, %s232
      %p241 = scmp.eq.s32.totalorder %s30, 3
      %p242 = por %p240, %p241
      %p243 = scmp.ne.s32.totalorder %s232, %s233
      %p244 = scmp.eq.s32.totalorder %s30, 0
      %p245 = por %p243, %p244
      %p246 = scmp.ne.s32.totalorder %s232, %s233
      %p247 = scmp.eq.s32.totalorder %s31, 3
      %p248 = por %p246, %p247
      %p250 = scmp.ne.s32.totalorder %s233, %s249
      %p251 = scmp.eq.s32.totalorder %s31, 0
      %p252 = por %p250, %p251
      %s253 = ssub.s32 %s33, %s40
      %p254 = scmp.eq.s32.totalorder %s253, 0
      %s256 = sadd.s32 %s255, 1
      %s257 = scalar_select %p254, %s255, %s256
      %p260 = pneg %p254
      %p261 = scmp.eq.s32.totalorder %s25, 3
      %p262 = por %p260, %p261
      %p263 = scmp.ne.s32.totalorder %s255, %s258
      %p264 = scmp.eq.s32.totalorder %s25, 0
      %p265 = por %p263, %p264
      %p266 = scmp.ne.s32.totalorder %s255, %s258
      %p267 = scmp.eq.s32.totalorder %s30, 3
      %p268 = por %p266, %p267
      %p269 = scmp.ne.s32.totalorder %s258, %s259
      %p270 = scmp.eq.s32.totalorder %s30, 0
      %p271 = por %p269, %p270
      %p272 = scmp.ne.s32.totalorder %s258, %s259
      %p273 = scmp.eq.s32.totalorder %s31, 3
      %p274 = por %p272, %p273
      %p276 = scmp.ne.s32.totalorder %s259, %s275
      %p277 = scmp.eq.s32.totalorder %s31, 0
      %p278 = por %p276, %p277
      %s279 = ssub.s32 %s33, %s40
      %p280 = scmp.eq.s32.totalorder %s279, 0
      %s282 = sadd.s32 %s281, 1
      %s283 = scalar_select %p280, %s281, %s282
      %p286 = pneg %p280
      %p287 = scmp.eq.s32.totalorder %s25, 3
      %p288 = por %p286, %p287
      %p289 = scmp.ne.s32.totalorder %s281, %s284
      %p290 = scmp.eq.s32.totalorder %s25, 0
      %p291 = por %p289, %p290
      %p292 = scmp.ne.s32.totalorder %s281, %s284
      %p293 = scmp.eq.s32.totalorder %s30, 3
      %p294 = por %p292, %p293
      %p295 = scmp.ne.s32.totalorder %s284, %s285
      %p296 = scmp.eq.s32.totalorder %s30, 0
      %p297 = por %p295, %p296
      %p298 = scmp.ne.s32.totalorder %s284, %s285
      %p299 = scmp.eq.s32.totalorder %s31, 3
      %p300 = por %p298, %p299
      %p302 = scmp.ne.s32.totalorder %s285, %s301
      %p303 = scmp.eq.s32.totalorder %s31, 0
      %p304 = por %p302, %p303
      %s305 = ssub.s32 %s33, %s40
      %p306 = scmp.eq.s32.totalorder %s305, 0
      %s308 = sadd.s32 %s307, 1
      %s309 = scalar_select %p306, %s307, %s308
      %p312 = pneg %p306
      %p313 = scmp.eq.s32.totalorder %s25, 3
      %p314 = por %p312, %p313
      %p315 = scmp.ne.s32.totalorder %s307, %s310
      %p316 = scmp.eq.s32.totalorder %s25, 0
      %p317 = por %p315, %p316
      %p318 = scmp.ne.s32.totalorder %s307, %s310
      %p319 = scmp.eq.s32.totalorder %s30, 3
      %p320 = por %p318, %p319
      %p321 = scmp.ne.s32.totalorder %s310, %s311
      %p322 = scmp.eq.s32.totalorder %s30, 0
      %p323 = por %p321, %p322
      %p324 = scmp.ne.s32.totalorder %s310, %s311
      %p325 = scmp.eq.s32.totalorder %s31, 3
      %p326 = por %p324, %p325
      %p328 = scmp.ne.s32.totalorder %s311, %s327
      %p329 = scmp.eq.s32.totalorder %s31, 0
      %p330 = por %p328, %p329
      %s331 = ssub.s32 %s33, %s40
      %p332 = scmp.eq.s32.totalorder %s331, 0
      %s334 = sadd.s32 %s333, 1
      %s335 = scalar_select %p332, %s333, %s334
      %p338 = pneg %p332
      %p339 = scmp.eq.s32.totalorder %s25, 3
      %p340 = por %p338, %p339
      %p341 = scmp.ne.s32.totalorder %s333, %s336
      %p342 = scmp.eq.s32.totalorder %s25, 0
      %p343 = por %p341, %p342
      %p344 = scmp.ne.s32.totalorder %s333, %s336
      %p345 = scmp.eq.s32.totalorder %s30, 3
      %p346 = por %p344, %p345
      %p347 = scmp.ne.s32.totalorder %s336, %s337
      %p348 = scmp.eq.s32.totalorder %s30, 0
      %p349 = por %p347, %p348
      %p350 = scmp.ne.s32.totalorder %s336, %s337
      %p351 = scmp.eq.s32.totalorder %s31, 3
      %p352 = por %p350, %p351
      %p354 = scmp.ne.s32.totalorder %s337, %s353
      %p355 = scmp.eq.s32.totalorder %s31, 0
      %p356 = por %p354, %p355
      %s357 = ssub.s32 %s33, %s40
      %p358 = scmp.eq.s32.totalorder %s357, 0
      %s360 = sadd.s32 %s359, 1
      %s361 = scalar_select %p358, %s359, %s360
      %p364 = pneg %p358
      %p365 = scmp.eq.s32.totalorder %s25, 3
      %p366 = por %p364, %p365
      %p367 = scmp.ne.s32.totalorder %s359, %s362
      %p368 = scmp.eq.s32.totalorder %s25, 0
      %p369 = por %p367, %p368
      %p370 = scmp.ne.s32.totalorder %s359, %s362
      %p371 = scmp.eq.s32.totalorder %s30, 3
      %p372 = por %p370, %p371
      %p373 = scmp.ne.s32.totalorder %s362, %s363
      %p374 = scmp.eq.s32.totalorder %s30, 0
      %p375 = por %p373, %p374
      %p376 = scmp.ne.s32.totalorder %s362, %s363
      %p377 = scmp.eq.s32.totalorder %s31, 3
      %p378 = por %p376, %p377
      %p380 = scmp.ne.s32.totalorder %s363, %s379
      %p381 = scmp.eq.s32.totalorder %s31, 0
      %p382 = por %p380, %p381
      %s384 = sadd.s32 %s383, 1
      %p387 = scmp.eq.s32.totalorder %s25, 3
      %p388 = scmp.ne.s32.totalorder %s383, %s385
      %p389 = scmp.eq.s32.totalorder %s25, 0
      %p390 = por %p388, %p389
      %p391 = scmp.ne.s32.totalorder %s383, %s385
      %p392 = scmp.eq.s32.totalorder %s30, 3
      %p393 = por %p391, %p392
      %p394 = scmp.ne.s32.totalorder %s385, %s386
      %p395 = scmp.eq.s32.totalorder %s30, 0
      %p396 = por %p394, %p395
      %p397 = scmp.ne.s32.totalorder %s385, %s386
      %p398 = scmp.eq.s32.totalorder %s31, 3
      %p399 = por %p397, %p398
      %p401 = scmp.ne.s32.totalorder %s386, %s400
      %p402 = scmp.eq.s32.totalorder %s31, 0
      %p403 = por %p401, %p402
      %s405 = sadd.s32 %s404, 1
      %p408 = scmp.eq.s32.totalorder %s25, 3
      %p409 = scmp.ne.s32.totalorder %s404, %s406
      %p410 = scmp.eq.s32.totalorder %s25, 0
      %p411 = por %p409, %p410
      %p412 = scmp.ne.s32.totalorder %s404, %s406
      %p413 = scmp.eq.s32.totalorder %s30, 3
      %p414 = por %p412, %p413
      %p415 = scmp.ne.s32.totalorder %s406, %s407
      %p416 = scmp.eq.s32.totalorder %s30, 0
      %p417 = por %p415, %p416
      %p418 = scmp.ne.s32.totalorder %s406, %s407
      %p419 = scmp.eq.s32.totalorder %s31, 3
      %p420 = por %p418, %p419
      %p422 = scmp.ne.s32.totalorder %s407, %s421
      %p423 = scmp.eq.s32.totalorder %s31, 0
      %p424 = por %p422, %p423
      %s426 = sadd.s32 %s425, 1
      %p429 = scmp.eq.s32.totalorder %s25, 3
      %p430 = scmp.ne.s32.totalorder %s425, %s427
      %p431 = scmp.eq.s32.totalorder %s25, 0
      %p432 = por %p430, %p431
      %p433 = scmp.ne.s32.totalorder %s425, %s427
      %p434 = scmp.eq.s32.totalorder %s30, 3
      %p435 = por %p433, %p434
      %p436 = scmp.ne.s32.totalorder %s427, %s428
      %p437 = scmp.eq.s32.totalorder %s30, 0
      %p438 = por %p436, %p437
      %p439 = scmp.ne.s32.totalorder %s427, %s428
      %p440 = scmp.eq.s32.totalorder %s31, 3
      %p441 = por %p439, %p440
      %p443 = scmp.ne.s32.totalorder %s428, %s442
      %p444 = scmp.eq.s32.totalorder %s31, 0
      %p445 = por %p443, %p444
      %s446 = ssub.s32 %s32, %s44
      %p447 = scmp.eq.s32.totalorder %s446, 0
      %s449 = sadd.s32 %s448, 1
      %s450 = scalar_select %p447, %s448, %s449
      %p453 = pneg %p447
      %p454 = scmp.eq.s32.totalorder %s25, 3
      %p455 = por %p453, %p454
      %p456 = scmp.ne.s32.totalorder %s448, %s451
      %p457 = scmp.eq.s32.totalorder %s25, 0
      %p458 = por %p456, %p457
      %p459 = scmp.ne.s32.totalorder %s448, %s451
      %p460 = scmp.eq.s32.totalorder %s30, 3
      %p461 = por %p459, %p460
      %p462 = scmp.ne.s32.totalorder %s451, %s452
      %p463 = scmp.eq.s32.totalorder %s30, 0
      %p464 = por %p462, %p463
      %p465 = scmp.ne.s32.totalorder %s451, %s452
      %p466 = scmp.eq.s32.totalorder %s31, 3
      %p467 = por %p465, %p466
      %p469 = scmp.ne.s32.totalorder %s452, %s468
      %p470 = scmp.eq.s32.totalorder %s31, 0
      %p471 = por %p469, %p470
      %p472 = scmp.le.s32.totalorder 1, %s25
      %p473 = scmp.lt.s32.totalorder %s25, 5
      %p474 = pnand %p472, %p473
      %p475 = pneg %p474
      // Predicated region
      $region9: #{tpu_custom_call.1} parent=5 // pred_check
        _
      $region10: #{tpu_custom_call.1} parent=5 // pred_check_branch
        %477 = sbr.rel (%p474) target = $region12
      $region11: #{tpu_custom_call.1} parent=5 // pred_region
        %s478 = ssub.s32 %s25, 1
        // Predicated region
        $region13: #{tpu_custom_call.1} parent=11 // pred_check
          %p479 = pneg %p396
        $region14: #{tpu_custom_call.1} parent=11 // pred_check_branch
          %481 = sbr.rel (%p479) target = $region16
        $region15: #{tpu_custom_call.1} parent=11 // pred_region
          _
        $region16: #{tpu_custom_call.1} parent=11 // pred_fallthru
          _
        // Predicated region
        $region17: #{tpu_custom_call.1} parent=11 // pred_check
          %p482 = pneg %p417
        $region18: #{tpu_custom_call.1} parent=11 // pred_check_branch
          %484 = sbr.rel (%p482) target = $region20
        $region19: #{tpu_custom_call.1} parent=11 // pred_region
          _
        $region20: #{tpu_custom_call.1} parent=11 // pred_fallthru
          _
        // Predicated region
        $region21: #{tpu_custom_call.1} parent=11 // pred_check
          %p485 = pneg %p438
        $region22: #{tpu_custom_call.1} parent=11 // pred_check_branch
          %487 = sbr.rel (%p485) target = $region24
        $region23: #{tpu_custom_call.1} parent=11 // pred_region
          _
        $region24: #{tpu_custom_call.1} parent=11 // pred_fallthru
          _
      $region12: #{tpu_custom_call.1} parent=5 // pred_fallthru
        _
      %p488 = scmp.lt.s32.totalorder %s25, 4
      // Predicated region
      $region25: #{tpu_custom_call.1} parent=5 // pred_check
        %p489 = pneg %p488
      $region26: #{tpu_custom_call.1} parent=5 // pred_check_branch
        %491 = sbr.rel (%p489) target = $region28
      $region27: #{tpu_custom_call.1} parent=5 // pred_region
        // Predicated region
        $region29: #{tpu_custom_call.1} parent=27 // pred_check
          %p492 = pneg %p57
        $region30: #{tpu_custom_call.1} parent=27 // pred_check_branch
          %494 = sbr.rel (%p492) target = $region32
        $region31: #{tpu_custom_call.1} parent=27 // pred_region
          %p495 = scmp.lt.s32.totalorder %s32, 1
          %s496 = scalar_select %p495, %s32, 1
          %s497 = smul.addr %s496, 8
          %s498 = scalar_lea.vmem %s0, %s497
        $region32: #{tpu_custom_call.1} parent=27 // pred_fallthru
          _
        // Predicated region
        $region33: #{tpu_custom_call.1} parent=27 // pred_check
          %p499 = pneg %p83
        $region34: #{tpu_custom_call.1} parent=27 // pred_check_branch
          %501 = sbr.rel (%p499) target = $region36
        $region35: #{tpu_custom_call.1} parent=27 // pred_region
          %p502 = scmp.lt.s32.totalorder %s33, 1
          %s503 = scalar_select %p502, %s33, 1
          %s504 = scalar_lea.vmem %s1, %s503
        $region36: #{tpu_custom_call.1} parent=27 // pred_fallthru
          _
        // Predicated region
        $region37: #{tpu_custom_call.1} parent=27 // pred_check
          %p505 = pneg %p109
        $region38: #{tpu_custom_call.1} parent=27 // pred_check_branch
          %507 = sbr.rel (%p505) target = $region40
        $region39: #{tpu_custom_call.1} parent=27 // pred_region
          %p508 = scmp.lt.s32.totalorder %s33, 1
          %s509 = scalar_select %p508, %s33, 1
          %s510 = scalar_lea.vmem %s2, %s509
        $region40: #{tpu_custom_call.1} parent=27 // pred_fallthru
          _
        // Predicated region
        $region41: #{tpu_custom_call.1} parent=27 // pred_check
          %p511 = pneg %p135
        $region42: #{tpu_custom_call.1} parent=27 // pred_check_branch
          %513 = sbr.rel (%p511) target = $region44
        $region43: #{tpu_custom_call.1} parent=27 // pred_region
          %p514 = scmp.lt.s32.totalorder %s33, 1
          %s515 = scalar_select %p514, %s33, 1
          %s516 = smul.addr %s515, 48
          %s517 = smul.addr %s516, 4
          %s518 = scalar_lea.vmem %s3, %s517
        $region44: #{tpu_custom_call.1} parent=27 // pred_fallthru
          _
        // Predicated region
        $region45: #{tpu_custom_call.1} parent=27 // pred_check
          %p519 = pneg %p161
        $region46: #{tpu_custom_call.1} parent=27 // pred_check_branch
          %521 = sbr.rel (%p519) target = $region48
        $region47: #{tpu_custom_call.1} parent=27 // pred_region
          %p522 = scmp.lt.s32.totalorder %s33, 1
          %s523 = scalar_select %p522, %s33, 1
          %s524 = smul.addr %s523, 12
          %s525 = scalar_lea.vmem %s4, %s524
        $region48: #{tpu_custom_call.1} parent=27 // pred_fallthru
          _
        // Predicated region
        $region49: #{tpu_custom_call.1} parent=27 // pred_check
          %p526 = pneg %p187
        $region50: #{tpu_custom_call.1} parent=27 // pred_check_branch
          %528 = sbr.rel (%p526) target = $region52
        $region51: #{tpu_custom_call.1} parent=27 // pred_region
          %p529 = scmp.lt.s32.totalorder %s33, 1
          %s530 = scalar_select %p529, %s33, 1
          %s531 = smul.addr %s530, 4
          %s532 = smul.addr %s531, 4
          %s533 = scalar_lea.vmem %s5, %s532
        $region52: #{tpu_custom_call.1} parent=27 // pred_fallthru
          _
        // Predicated region
        $region53: #{tpu_custom_call.1} parent=27 // pred_check
          %p534 = pneg %p213
        $region54: #{tpu_custom_call.1} parent=27 // pred_check_branch
          %536 = sbr.rel (%p534) target = $region56
        $region55: #{tpu_custom_call.1} parent=27 // pred_region
          %p537 = scmp.lt.s32.totalorder %s33, 1
          %s538 = scalar_select %p537, %s33, 1
          %s539 = scalar_lea.vmem %s6, %s538
        $region56: #{tpu_custom_call.1} parent=27 // pred_fallthru
          _
        // Predicated region
        $region57: #{tpu_custom_call.1} parent=27 // pred_check
          %p540 = pneg %p239
        $region58: #{tpu_custom_call.1} parent=27 // pred_check_branch
          %542 = sbr.rel (%p540) target = $region60
        $region59: #{tpu_custom_call.1} parent=27 // pred_region
          %p543 = scmp.lt.s32.totalorder %s33, 1
          %s544 = scalar_select %p543, %s33, 1
          %s545 = scalar_lea.vmem %s7, %s544
        $region60: #{tpu_custom_call.1} parent=27 // pred_fallthru
          _
        // Predicated region
        $region61: #{tpu_custom_call.1} parent=27 // pred_check
          %p546 = pneg %p265
        $region62: #{tpu_custom_call.1} parent=27 // pred_check_branch
          %548 = sbr.rel (%p546) target = $region64
        $region63: #{tpu_custom_call.1} parent=27 // pred_region
          %p549 = scmp.lt.s32.totalorder %s33, 1
          %s550 = scalar_select %p549, %s33, 1
          %s551 = scalar_lea.vmem %s8, %s550
        $region64: #{tpu_custom_call.1} parent=27 // pred_fallthru
          _
        // Predicated region
        $region65: #{tpu_custom_call.1} parent=27 // pred_check
          %p552 = pneg %p291
        $region66: #{tpu_custom_call.1} parent=27 // pred_check_branch
          %554 = sbr.rel (%p552) target = $region68
        $region67: #{tpu_custom_call.1} parent=27 // pred_region
          %p555 = scmp.lt.s32.totalorder %s33, 1
          %s556 = scalar_select %p555, %s33, 1
          %s557 = smul.addr %s556, 4
          %s558 = smul.addr %s557, 4
          %s559 = scalar_lea.vmem %s9, %s558
        $region68: #{tpu_custom_call.1} parent=27 // pred_fallthru
          _
        // Predicated region
        $region69: #{tpu_custom_call.1} parent=27 // pred_check
          %p560 = pneg %p317
        $region70: #{tpu_custom_call.1} parent=27 // pred_check_branch
          %562 = sbr.rel (%p560) target = $region72
        $region71: #{tpu_custom_call.1} parent=27 // pred_region
          %p563 = scmp.lt.s32.totalorder %s33, 1
          %s564 = scalar_select %p563, %s33, 1
          %s565 = scalar_lea.vmem %s10, %s564
        $region72: #{tpu_custom_call.1} parent=27 // pred_fallthru
          _
        // Predicated region
        $region73: #{tpu_custom_call.1} parent=27 // pred_check
          %p566 = pneg %p343
        $region74: #{tpu_custom_call.1} parent=27 // pred_check_branch
          %568 = sbr.rel (%p566) target = $region76
        $region75: #{tpu_custom_call.1} parent=27 // pred_region
          %p569 = scmp.lt.s32.totalorder %s33, 1
          %s570 = scalar_select %p569, %s33, 1
          %s571 = smul.addr %s570, 16
          %s572 = smul.addr %s571, 4
          %s573 = scalar_lea.vmem %s11, %s572
        $region76: #{tpu_custom_call.1} parent=27 // pred_fallthru
          _
        // Predicated region
        $region77: #{tpu_custom_call.1} parent=27 // pred_check
          %p574 = pneg %p369
        $region78: #{tpu_custom_call.1} parent=27 // pred_check_branch
          %576 = sbr.rel (%p574) target = $region80
        $region79: #{tpu_custom_call.1} parent=27 // pred_region
          %p577 = scmp.lt.s32.totalorder %s33, 1
          %s578 = scalar_select %p577, %s33, 1
          %s579 = scalar_lea.vmem %s12, %s578
        $region80: #{tpu_custom_call.1} parent=27 // pred_fallthru
          _
      $region28: #{tpu_custom_call.1} parent=5 // pred_fallthru
        _
      %p580 = scmp.le.s32.totalorder 1, %s25
      %p581 = scmp.lt.s32.totalorder %s25, 5
      %p582 = pnand %p580, %p581
      %p583 = pneg %p582
      // Predicated region
      $region81: #{tpu_custom_call.1} parent=5 // pred_check
        _
      $region82: #{tpu_custom_call.1} parent=5 // pred_check_branch
        %585 = sbr.rel (%p582) target = $region84
      $region83: #{tpu_custom_call.1} parent=5 // pred_region
        %s586 = ssub.s32 %s25, 1
        %p587 = scmp.lt.s32.totalorder %s34, 1
        %s588 = scalar_select %p587, %s34, 1
        %s589 = smul.addr %s588, 8
        %s590 = scalar_lea.vmem %s0, %s589
        %p591 = pneg %p63
        %p592 = pneg %p60
        %p593 = scmp.lt.s32.totalorder %s35, 1
        %s594 = scalar_select %p593, %s35, 1
        %s595 = scalar_lea.vmem %s1, %s594
        %p596 = pneg %p89
        %p597 = pneg %p86
        %p598 = scmp.lt.s32.totalorder %s35, 1
        %s599 = scalar_select %p598, %s35, 1
        %s600 = scalar_lea.vmem %s2, %s599
        %p601 = pneg %p115
        %p602 = pneg %p112
        %p603 = scmp.lt.s32.totalorder %s35, 1
        %s604 = scalar_select %p603, %s35, 1
        %s605 = smul.addr %s604, 48
        %s606 = smul.addr %s605, 4
        %s607 = scalar_lea.vmem %s3, %s606
        %p608 = pneg %p141
        %p609 = pneg %p138
        %p610 = scmp.lt.s32.totalorder %s35, 1
        %s611 = scalar_select %p610, %s35, 1
        %s612 = smul.addr %s611, 12
        %s613 = scalar_lea.vmem %s4, %s612
        %p614 = pneg %p167
        %p615 = pneg %p164
        %p616 = scmp.lt.s32.totalorder %s35, 1
        %s617 = scalar_select %p616, %s35, 1
        %s618 = smul.addr %s617, 4
        %s619 = smul.addr %s618, 4
        %s620 = scalar_lea.vmem %s5, %s619
        %p621 = pneg %p193
        %p622 = pneg %p190
        %p623 = scmp.lt.s32.totalorder %s35, 1
        %s624 = scalar_select %p623, %s35, 1
        %s625 = scalar_lea.vmem %s6, %s624
        %p626 = pneg %p219
        %p627 = pneg %p216
        %p628 = scmp.lt.s32.totalorder %s35, 1
        %s629 = scalar_select %p628, %s35, 1
        %s630 = scalar_lea.vmem %s7, %s629
        %p631 = pneg %p245
        %p632 = pneg %p242
        %p633 = scmp.lt.s32.totalorder %s35, 1
        %s634 = scalar_select %p633, %s35, 1
        %s635 = scalar_lea.vmem %s8, %s634
        %p636 = pneg %p271
        %p637 = pneg %p268
        %p638 = scmp.lt.s32.totalorder %s35, 1
        %s639 = scalar_select %p638, %s35, 1
        %s640 = smul.addr %s639, 4
        %s641 = smul.addr %s640, 4
        %s642 = scalar_lea.vmem %s9, %s641
        %p643 = pneg %p297
        %p644 = pneg %p294
        %p645 = scmp.lt.s32.totalorder %s35, 1
        %s646 = scalar_select %p645, %s35, 1
        %s647 = scalar_lea.vmem %s10, %s646
        %p648 = pneg %p323
        %p649 = pneg %p320
        %p650 = scmp.lt.s32.totalorder %s35, 1
        %s651 = scalar_select %p650, %s35, 1
        %s652 = smul.addr %s651, 16
        %s653 = smul.addr %s652, 4
        %s654 = scalar_lea.vmem %s11, %s653
        %p655 = pneg %p349
        %p656 = pneg %p346
        %p657 = scmp.lt.s32.totalorder %s35, 1
        %s658 = scalar_select %p657, %s35, 1
        %s659 = scalar_lea.vmem %s12, %s658
        %p660 = pneg %p375
        %p661 = pneg %p372
        %p662 = pneg %p396
        %p663 = pneg %p393
        %p664 = pneg %p417
        %p665 = pneg %p414
        %p666 = pneg %p438
        %p667 = pneg %p435
        %p668 = pneg %p464
        %p669 = pneg %p461
        %s670 = sand.u32 %s451, 1
        %s671 = scalar_lea.sflag [#allocation4], %s670
        %s672 = sand.u32 %s451, 1
        %s673 = smul.addr %s672, 8
        %s674 = scalar_lea.vmem [#allocation3], %s673
        %p675 = scmp.lt.s32.totalorder %s34, 1
        %s676 = scalar_select %p675, %s34, 1
        %s677 = smul.addr %s676, 8
        %s678 = scalar_lea.vmem %s0, %s677
        %p679 = scmp.lt.s32.totalorder %s35, 1
        %s680 = scalar_select %p679, %s35, 1
        %s681 = scalar_lea.vmem %s1, %s680
        %p682 = scmp.lt.s32.totalorder %s35, 1
        %s683 = scalar_select %p682, %s35, 1
        %s684 = scalar_lea.vmem %s2, %s683
        %p685 = scmp.lt.s32.totalorder %s35, 1
        %s686 = scalar_select %p685, %s35, 1
        %s687 = smul.addr %s686, 48
        %s688 = smul.addr %s687, 4
        %s689 = scalar_lea.vmem %s3, %s688
        %p690 = scmp.lt.s32.totalorder %s35, 1
        %s691 = scalar_select %p690, %s35, 1
        %s692 = smul.addr %s691, 12
        %s693 = scalar_lea.vmem %s4, %s692
        %p694 = scmp.lt.s32.totalorder %s35, 1
        %s695 = scalar_select %p694, %s35, 1
        %s696 = smul.addr %s695, 4
        %s697 = smul.addr %s696, 4
        %s698 = scalar_lea.vmem %s5, %s697
        %p699 = scmp.lt.s32.totalorder %s35, 1
        %s700 = scalar_select %p699, %s35, 1
        %s701 = scalar_lea.vmem %s6, %s700
        %p702 = scmp.lt.s32.totalorder %s35, 1
        %s703 = scalar_select %p702, %s35, 1
        %s704 = scalar_lea.vmem %s7, %s703
        %p705 = scmp.lt.s32.totalorder %s35, 1
        %s706 = scalar_select %p705, %s35, 1
        %s707 = scalar_lea.vmem %s8, %s706
        %p708 = scmp.lt.s32.totalorder %s35, 1
        %s709 = scalar_select %p708, %s35, 1
        %s710 = smul.addr %s709, 4
        %s711 = smul.addr %s710, 4
        %s712 = scalar_lea.vmem %s9, %s711
        %p713 = scmp.lt.s32.totalorder %s35, 1
        %s714 = scalar_select %p713, %s35, 1
        %s715 = scalar_lea.vmem %s10, %s714
        %p716 = scmp.lt.s32.totalorder %s35, 1
        %s717 = scalar_select %p716, %s35, 1
        %s718 = smul.addr %s717, 16
        %s719 = smul.addr %s718, 4
        %s720 = scalar_lea.vmem %s11, %s719
        %p721 = scmp.lt.s32.totalorder %s35, 1
        %s722 = scalar_select %p721, %s35, 1
        %s723 = scalar_lea.vmem %s12, %s722
        %p725 = scmp.eq.s32.totalorder %s35, 0
        // Predicated region
        $region85: #{tpu_custom_call.1} parent=83 // pred_check
          %p726 = pneg %p725
        $region86: #{tpu_custom_call.1} parent=83 // pred_check_branch
          %728 = sbr.rel (%p726) target = $region88
        $region87: #{tpu_custom_call.1} parent=83 // pred_region
          %v729 = vld [vmem:[%s678] sm:$0xff]
          %vm730 = vcmask 261120
          %731 = vst.msk [vmem:[#allocation2] sm:$0xff] %vm730, %v729
        $region88: #{tpu_custom_call.1} parent=83 // pred_fallthru
          _
        %v732 = vld [vmem:[#allocation2] sm:$0xff]
        %v733 = vlaneseq
        %v734 = vshrl.u32 %v733, 7
        %v735 = vlaneseq
        %v736 = vand.u32 %v735, 127
        %vm737 = vcmp.le.s32.totalorder %v736, %v734
        %v738 = vld [vmem:[%s681] sm:$0x1]
        %v739 = vld [vmem:[%s684] sm:$0x1]
        %vm740 = vcmask 261120
        %v741 = vsel %vm740, %v732, 0.0
        %742 = vadd.xlane.f32.xlu0 %v741
        %v743 = vpop.xlane.xlu0 %742
        %v744 = vrcp.pop 32.0
        %v745 = vmul.f32 %v743, %v744
        %v746 = vsub.f32 %v732, %v745
        %v747 = vmul.f32 %v746, %v746
        %v748 = vsel %vm740, %v747, 0.0
        %749 = vadd.xlane.f32.xlu0 %v748
        %v750 = vpop.xlane.xlu0 %749
        %v751 = vmul.f32 %v750, %v744
        %v752 = vadd.f32 %v751, 1e-05
        %v753 = vrsqrt.pop %v752
        %v754 = vmul.f32 %v746, %v753
        %v756 = vlaneseq
        %v757 = vshrl.u32 %v756, 7
        %v758 = vsub.s32 0, %v757
        %v759 = vrot.slane %v738, %v758
        %v761 = vmul.f32 %v754, %v759
        %v763 = vlaneseq
        %v764 = vshrl.u32 %v763, 7
        %v765 = vsub.s32 0, %v764
        %v766 = vrot.slane %v739, %v765
        %v768 = vadd.f32 %v761, %v766
        %v769 = vpack.c.bf16 %v768, %v768
        %v770 = vld [vmem:[%s689] sm:$0xf]
        %v771 = vld [vmem:[%s689 + $0x4] sm:$0xf]
        %v772 = vld [vmem:[%s689 + $0x8] sm:$0xf]
        %v773 = vld [vmem:[%s689 + $0xc] sm:$0xf]
        %v774 = vld [vmem:[%s689 + $0x10] sm:$0xf]
        %v775 = vld [vmem:[%s689 + $0x14] sm:$0xf]
        %v776 = vld [vmem:[%s689 + $0x18] sm:$0xf]
        %v777 = vld [vmem:[%s689 + $0x1c] sm:$0xf]
        %v778 = vld [vmem:[%s689 + $0x20] sm:$0xf]
        %v779 = vld [vmem:[%s689 + $0x24] sm:$0xf]
        %v780 = vld [vmem:[%s689 + $0x28] sm:$0xf]
        %v781 = vld [vmem:[%s689 + $0x2c] sm:$0xf]
        %v782 = vld [vmem:[%s689 + $0x30] sm:$0xf]
        %v783 = vld [vmem:[%s689 + $0x34] sm:$0xf]
        %v784 = vld [vmem:[%s689 + $0x38] sm:$0xf]
        %v785 = vld [vmem:[%s689 + $0x3c] sm:$0xf]
        %v786 = vld [vmem:[%s689 + $0x40] sm:$0xf]
        %v787 = vld [vmem:[%s689 + $0x44] sm:$0xf]
        %v788 = vld [vmem:[%s689 + $0x48] sm:$0xf]
        %v789 = vld [vmem:[%s689 + $0x4c] sm:$0xf]
        %v790 = vld [vmem:[%s689 + $0x50] sm:$0xf]
        %v791 = vld [vmem:[%s689 + $0x54] sm:$0xf]
        %v792 = vld [vmem:[%s689 + $0x58] sm:$0xf]
        %v793 = vld [vmem:[%s689 + $0x5c] sm:$0xf]
        %v794 = vld [vmem:[%s689 + $0x60] sm:$0xf]
        %v795 = vld [vmem:[%s689 + $0x64] sm:$0xf]
        %v796 = vld [vmem:[%s689 + $0x68] sm:$0xf]
        %v797 = vld [vmem:[%s689 + $0x6c] sm:$0xf]
        %v798 = vld [vmem:[%s689 + $0x70] sm:$0xf]
        %v799 = vld [vmem:[%s689 + $0x74] sm:$0xf]
        %v800 = vld [vmem:[%s689 + $0x78] sm:$0xf]
        %v801 = vld [vmem:[%s689 + $0x7c] sm:$0xf]
        %v802 = vld [vmem:[%s689 + $0x80] sm:$0xf]
        %v803 = vld [vmem:[%s689 + $0x84] sm:$0xf]
        %v804 = vld [vmem:[%s689 + $0x88] sm:$0xf]
        %v805 = vld [vmem:[%s689 + $0x8c] sm:$0xf]
        %v806 = vld [vmem:[%s689 + $0x90] sm:$0xf]
        %v807 = vld [vmem:[%s689 + $0x94] sm:$0xf]
        %v808 = vld [vmem:[%s689 + $0x98] sm:$0xf]
        %v809 = vld [vmem:[%s689 + $0x9c] sm:$0xf]
        %v810 = vld [vmem:[%s689 + $0xa0] sm:$0xf]
        %v811 = vld [vmem:[%s689 + $0xa4] sm:$0xf]
        %v812 = vld [vmem:[%s689 + $0xa8] sm:$0xf]
        %v813 = vld [vmem:[%s689 + $0xac] sm:$0xf]
        %v814 = vld [vmem:[%s689 + $0xb0] sm:$0xf]
        %v815 = vld [vmem:[%s689 + $0xb4] sm:$0xf]
        %v816 = vld [vmem:[%s689 + $0xb8] sm:$0xf]
        %v817 = vld [vmem:[%s689 + $0xbc] sm:$0xf]
        %v818 = vld [vmem:[%s693] sm:$0x1]
        %v819 = vld [vmem:[%s693 + $0x1] sm:$0x1]
        %v820 = vld [vmem:[%s693 + $0x2] sm:$0x1]
        %v821 = vld [vmem:[%s693 + $0x3] sm:$0x1]
        %v822 = vld [vmem:[%s693 + $0x4] sm:$0x1]
        %v823 = vld [vmem:[%s693 + $0x5] sm:$0x1]
        %v824 = vld [vmem:[%s693 + $0x6] sm:$0x1]
        %v825 = vld [vmem:[%s693 + $0x7] sm:$0x1]
        %v826 = vld [vmem:[%s693 + $0x8] sm:$0x1]
        %v827 = vld [vmem:[%s693 + $0x9] sm:$0x1]
        %v828 = vld [vmem:[%s693 + $0xa] sm:$0x1]
        %v829 = vld [vmem:[%s693 + $0xb] sm:$0x1]
        %v842 = vlaneseq
        %v843 = vshrl.u32 %v842, 7
        %v844 = vsub.s32 0, %v843
        %v845 = vrot.slane %v818, %v844
        %v846 = vlaneseq
        %v847 = vshrl.u32 %v846, 7
        %v848 = vsub.s32 0, %v847
        %v849 = vrot.slane %v819, %v848
        %v850 = vlaneseq
        %v851 = vshrl.u32 %v850, 7
        %v852 = vsub.s32 0, %v851
        %v853 = vrot.slane %v820, %v852
        %v854 = vlaneseq
        %v855 = vshrl.u32 %v854, 7
        %v856 = vsub.s32 0, %v855
        %v857 = vrot.slane %v821, %v856
        %v858 = vlaneseq
        %v859 = vshrl.u32 %v858, 7
        %v860 = vsub.s32 0, %v859
        %v861 = vrot.slane %v822, %v860
        %v862 = vlaneseq
        %v863 = vshrl.u32 %v862, 7
        %v864 = vsub.s32 0, %v863
        %v865 = vrot.slane %v823, %v864
        %v866 = vlaneseq
        %v867 = vshrl.u32 %v866, 7
        %v868 = vsub.s32 0, %v867
        %v869 = vrot.slane %v824, %v868
        %v870 = vlaneseq
        %v871 = vshrl.u32 %v870, 7
        %v872 = vsub.s32 0, %v871
        %v873 = vrot.slane %v825, %v872
        %v874 = vlaneseq
        %v875 = vshrl.u32 %v874, 7
        %v876 = vsub.s32 0, %v875
        %v877 = vrot.slane %v826, %v876
        %v878 = vlaneseq
        %v879 = vshrl.u32 %v878, 7
        %v880 = vsub.s32 0, %v879
        %v881 = vrot.slane %v827, %v880
        %v882 = vlaneseq
        %v883 = vshrl.u32 %v882, 7
        %v884 = vsub.s32 0, %v883
        %v885 = vrot.slane %v828, %v884
        %v886 = vlaneseq
        %v887 = vshrl.u32 %v886, 7
        %v888 = vsub.s32 0, %v887
        %v889 = vrot.slane %v829, %v888
        %v906 = vunpack.c.l.b16 %v770
        %v907 = vunpack.c.l.b16 %v771
        %v908 = vunpack.c.l.b16 %v772
        %v909 = vunpack.c.l.b16 %v773
        %v910 = vpack.c.b16 %v907, %v906
        %v911 = vpack.c.b16 %v909, %v908
        %v915 = vsel %vm740, %v769, 0
        %917 = vmatprep.subr.bf16.mxu0 0
        %918 = vmatpush1.bf16.msra.mxu0 %v910
        %919 = vmatprep.subr.bf16.mxu0 0
        %920 = vmatpush1.bf16.msra.mxu0 %v911
        %921 = vmatprep.subr.bf16.mxu0 0
        %922 = vmatpush1.bf16.msra.mxu0 0
        %923 = vmatprep.subr.bf16.mxu0 0
        %924 = vmatpush1.bf16.msra.mxu0 0
        %925 = vmatprep.subr.bf16.mxu0 0
        %926 = vmatpush1.bf16.msra.mxu0 0
        %927 = vmatprep.subr.bf16.mxu0 0
        %928 = vmatpush1.bf16.msra.mxu0 0
        %929 = vmatprep.subr.bf16.mxu0 0
        %930 = vmatpush1.bf16.msra.mxu0 0
        %931 = vmatprep.subr.bf16.mxu0 0
        %932 = vmatpush1.bf16.msra.mxu0 0
        %933 = vmatprep.subr.bf16.mxu0 0
        %934 = vmatpush1.bf16.msra.mxu0 0
        %935 = vmatprep.subr.bf16.mxu0 0
        %936 = vmatpush1.bf16.msra.mxu0 0
        %937 = vmatprep.subr.bf16.mxu0 0
        %938 = vmatpush1.bf16.msra.mxu0 0
        %939 = vmatprep.subr.bf16.mxu0 0
        %940 = vmatpush1.bf16.msra.mxu0 0
        %941 = vmatprep.subr.bf16.mxu0 0
        %942 = vmatpush1.bf16.msra.mxu0 0
        %943 = vmatprep.subr.bf16.mxu0 0
        %944 = vmatpush1.bf16.msra.mxu0 0
        %945 = vmatprep.subr.bf16.mxu0 0
        %946 = vmatpush1.bf16.msra.mxu0 0
        %947 = vmatprep.subr.bf16.mxu0 0
        %948 = vmatpush1.bf16.msra.mxu0 0
        %949 = vmatprep.mubr.bf16.mxu0 0
        %950 = vmatmul.mubr.bf16.gmra.mrb[0].mxu0 %v915
        %v951 = vpop.f32.mrb[0].mxu0
        %v952 = vadd.f32 %v845, %v951
        %v953 = vpop.f32.mrb[0].mxu0
        %v954 = vpop.f32.mrb[0].mxu0
        %v955 = vpop.f32.mrb[0].mxu0
        %956 = vdwg.mxu0
        %v961 = vunpack.c.l.b16 %v774
        %v962 = vunpack.c.l.b16 %v775
        %v963 = vunpack.c.l.b16 %v776
        %v964 = vunpack.c.l.b16 %v777
        %v965 = vpack.c.b16 %v962, %v961
        %v966 = vpack.c.b16 %v964, %v963
        %969 = vmatprep.subr.bf16.mxu0 0
        %970 = vmatpush1.bf16.msra.mxu0 %v965
        %971 = vmatprep.subr.bf16.mxu0 0
        %972 = vmatpush1.bf16.msra.mxu0 %v966
        %973 = vmatprep.subr.bf16.mxu0 0
        %974 = vmatpush1.bf16.msra.mxu0 0
        %975 = vmatprep.subr.bf16.mxu0 0
        %976 = vmatpush1.bf16.msra.mxu0 0
        %977 = vmatprep.subr.bf16.mxu0 0
        %978 = vmatpush1.bf16.msra.mxu0 0
        %979 = vmatprep.subr.bf16.mxu0 0
        %980 = vmatpush1.bf16.msra.mxu0 0
        %981 = vmatprep.subr.bf16.mxu0 0
        %982 = vmatpush1.bf16.msra.mxu0 0
        %983 = vmatprep.subr.bf16.mxu0 0
        %984 = vmatpush1.bf16.msra.mxu0 0
        %985 = vmatprep.subr.bf16.mxu0 0
        %986 = vmatpush1.bf16.msra.mxu0 0
        %987 = vmatprep.subr.bf16.mxu0 0
        %988 = vmatpush1.bf16.msra.mxu0 0
        %989 = vmatprep.subr.bf16.mxu0 0
        %990 = vmatpush1.bf16.msra.mxu0 0
        %991 = vmatprep.subr.bf16.mxu0 0
        %992 = vmatpush1.bf16.msra.mxu0 0
        %993 = vmatprep.subr.bf16.mxu0 0
        %994 = vmatpush1.bf16.msra.mxu0 0
        %995 = vmatprep.subr.bf16.mxu0 0
        %996 = vmatpush1.bf16.msra.mxu0 0
        %997 = vmatprep.subr.bf16.mxu0 0
        %998 = vmatpush1.bf16.msra.mxu0 0
        %999 = vmatprep.subr.bf16.mxu0 0
        %1000 = vmatpush1.bf16.msra.mxu0 0
        %1001 = vmatprep.mubr.bf16.mxu0 0
        %1002 = vmatmul.mubr.bf16.gmra.mrb[0].mxu0 %v915
        %v1003 = vpop.f32.mrb[0].mxu0
        %v1004 = vadd.f32 %v849, %v1003
        %v1005 = vpop.f32.mrb[0].mxu0
        %v1006 = vpop.f32.mrb[0].mxu0
        %v1007 = vpop.f32.mrb[0].mxu0
        %1008 = vdwg.mxu0
        %v1013 = vunpack.c.l.b16 %v778
        %v1014 = vunpack.c.l.b16 %v779
        %v1015 = vunpack.c.l.b16 %v780
        %v1016 = vunpack.c.l.b16 %v781
        %v1017 = vpack.c.b16 %v1014, %v1013
        %v1018 = vpack.c.b16 %v1016, %v1015
        %1021 = vmatprep.subr.bf16.mxu0 0
        %1022 = vmatpush1.bf16.msra.mxu0 %v1017
        %1023 = vmatprep.subr.bf16.mxu0 0
        %1024 = vmatpush1.bf16.msra.mxu0 %v1018
        %1025 = vmatprep.subr.bf16.mxu0 0
        %1026 = vmatpush1.bf16.msra.mxu0 0
        %1027 = vmatprep.subr.bf16.mxu0 0
        %1028 = vmatpush1.bf16.msra.mxu0 0
        %1029 = vmatprep.subr.bf16.mxu0 0
        %1030 = vmatpush1.bf16.msra.mxu0 0
        %1031 = vmatprep.subr.bf16.mxu0 0
        %1032 = vmatpush1.bf16.msra.mxu0 0
        %1033 = vmatprep.subr.bf16.mxu0 0
        %1034 = vmatpush1.bf16.msra.mxu0 0
        %1035 = vmatprep.subr.bf16.mxu0 0
        %1036 = vmatpush1.bf16.msra.mxu0 0
        %1037 = vmatprep.subr.bf16.mxu0 0
        %1038 = vmatpush1.bf16.msra.mxu0 0
        %1039 = vmatprep.subr.bf16.mxu0 0
        %1040 = vmatpush1.bf16.msra.mxu0 0
        %1041 = vmatprep.subr.bf16.mxu0 0
        %1042 = vmatpush1.bf16.msra.mxu0 0
        %1043 = vmatprep.subr.bf16.mxu0 0
        %1044 = vmatpush1.bf16.msra.mxu0 0
        %1045 = vmatprep.subr.bf16.mxu0 0
        %1046 = vmatpush1.bf16.msra.mxu0 0
        %1047 = vmatprep.subr.bf16.mxu0 0
        %1048 = vmatpush1.bf16.msra.mxu0 0
        %1049 = vmatprep.subr.bf16.mxu0 0
        %1050 = vmatpush1.bf16.msra.mxu0 0
        %1051 = vmatprep.subr.bf16.mxu0 0
        %1052 = vmatpush1.bf16.msra.mxu0 0
        %1053 = vmatprep.mubr.bf16.mxu0 0
        %1054 = vmatmul.mubr.bf16.gmra.mrb[0].mxu0 %v915
        %v1055 = vpop.f32.mrb[0].mxu0
        %v1056 = vadd.f32 %v853, %v1055
        %v1057 = vpop.f32.mrb[0].mxu0
        %v1058 = vpop.f32.mrb[0].mxu0
        %v1059 = vpop.f32.mrb[0].mxu0
        %1060 = vdwg.mxu0
        %v1065 = vunpack.c.l.b16 %v782
        %v1066 = vunpack.c.l.b16 %v783
        %v1067 = vunpack.c.l.b16 %v784
        %v1068 = vunpack.c.l.b16 %v785
        %v1069 = vpack.c.b16 %v1066, %v1065
        %v1070 = vpack.c.b16 %v1068, %v1067
        %1073 = vmatprep.subr.bf16.mxu0 0
        %1074 = vmatpush1.bf16.msra.mxu0 %v1069
        %1075 = vmatprep.subr.bf16.mxu0 0
        %1076 = vmatpush1.bf16.msra.mxu0 %v1070
        %1077 = vmatprep.subr.bf16.mxu0 0
        %1078 = vmatpush1.bf16.msra.mxu0 0
        %1079 = vmatprep.subr.bf16.mxu0 0
        %1080 = vmatpush1.bf16.msra.mxu0 0
        %1081 = vmatprep.subr.bf16.mxu0 0
        %1082 = vmatpush1.bf16.msra.mxu0 0
        %1083 = vmatprep.subr.bf16.mxu0 0
        %1084 = vmatpush1.bf16.msra.mxu0 0
        %1085 = vmatprep.subr.bf16.mxu0 0
        %1086 = vmatpush1.bf16.msra.mxu0 0
        %1087 = vmatprep.subr.bf16.mxu0 0
        %1088 = vmatpush1.bf16.msra.mxu0 0
        %1089 = vmatprep.subr.bf16.mxu0 0
        %1090 = vmatpush1.bf16.msra.mxu0 0
        %1091 = vmatprep.subr.bf16.mxu0 0
        %1092 = vmatpush1.bf16.msra.mxu0 0
        %1093 = vmatprep.subr.bf16.mxu0 0
        %1094 = vmatpush1.bf16.msra.mxu0 0
        %1095 = vmatprep.subr.bf16.mxu0 0
        %1096 = vmatpush1.bf16.msra.mxu0 0
        %1097 = vmatprep.subr.bf16.mxu0 0
        %1098 = vmatpush1.bf16.msra.mxu0 0
        %1099 = vmatprep.subr.bf16.mxu0 0
        %1100 = vmatpush1.bf16.msra.mxu0 0
        %1101 = vmatprep.subr.bf16.mxu0 0
        %1102 = vmatpush1.bf16.msra.mxu0 0
        %1103 = vmatprep.subr.bf16.mxu0 0
        %1104 = vmatpush1.bf16.msra.mxu0 0
        %1105 = vmatprep.mubr.bf16.mxu0 0
        %1106 = vmatmul.mubr.bf16.gmra.mrb[0].mxu0 %v915
        %v1107 = vpop.f32.mrb[0].mxu0
        %v1108 = vadd.f32 %v857, %v1107
        %v1109 = vpop.f32.mrb[0].mxu0
        %v1110 = vpop.f32.mrb[0].mxu0
        %v1111 = vpop.f32.mrb[0].mxu0
        %1112 = vdwg.mxu0
        %v1117 = vunpack.c.l.b16 %v786
        %v1118 = vunpack.c.l.b16 %v787
        %v1119 = vunpack.c.l.b16 %v788
        %v1120 = vunpack.c.l.b16 %v789
        %v1121 = vpack.c.b16 %v1118, %v1117
        %v1122 = vpack.c.b16 %v1120, %v1119
        %1125 = vmatprep.subr.bf16.mxu0 0
        %1126 = vmatpush1.bf16.msra.mxu0 %v1121
        %1127 = vmatprep.subr.bf16.mxu0 0
        %1128 = vmatpush1.bf16.msra.mxu0 %v1122
        %1129 = vmatprep.subr.bf16.mxu0 0
        %1130 = vmatpush1.bf16.msra.mxu0 0
        %1131 = vmatprep.subr.bf16.mxu0 0
        %1132 = vmatpush1.bf16.msra.mxu0 0
        %1133 = vmatprep.subr.bf16.mxu0 0
        %1134 = vmatpush1.bf16.msra.mxu0 0
        %1135 = vmatprep.subr.bf16.mxu0 0
        %1136 = vmatpush1.bf16.msra.mxu0 0
        %1137 = vmatprep.subr.bf16.mxu0 0
        %1138 = vmatpush1.bf16.msra.mxu0 0
        %1139 = vmatprep.subr.bf16.mxu0 0
        %1140 = vmatpush1.bf16.msra.mxu0 0
        %1141 = vmatprep.subr.bf16.mxu0 0
        %1142 = vmatpush1.bf16.msra.mxu0 0
        %1143 = vmatprep.subr.bf16.mxu0 0
        %1144 = vmatpush1.bf16.msra.mxu0 0
        %1145 = vmatprep.subr.bf16.mxu0 0
        %1146 = vmatpush1.bf16.msra.mxu0 0
        %1147 = vmatprep.subr.bf16.mxu0 0
        %1148 = vmatpush1.bf16.msra.mxu0 0
        %1149 = vmatprep.subr.bf16.mxu0 0
        %1150 = vmatpush1.bf16.msra.mxu0 0
        %1151 = vmatprep.subr.bf16.mxu0 0
        %1152 = vmatpush1.bf16.msra.mxu0 0
        %1153 = vmatprep.subr.bf16.mxu0 0
        %1154 = vmatpush1.bf16.msra.mxu0 0
        %1155 = vmatprep.subr.bf16.mxu0 0
        %1156 = vmatpush1.bf16.msra.mxu0 0
        %1157 = vmatprep.mubr.bf16.mxu0 0
        %1158 = vmatmul.mubr.bf16.gmra.mrb[0].mxu0 %v915
        %v1159 = vpop.f32.mrb[0].mxu0
        %v1160 = vadd.f32 %v861, %v1159
        %v1161 = vpop.f32.mrb[0].mxu0
        %v1162 = vpop.f32.mrb[0].mxu0
        %v1163 = vpop.f32.mrb[0].mxu0
        %1164 = vdwg.mxu0
        %v1169 = vunpack.c.l.b16 %v790
        %v1170 = vunpack.c.l.b16 %v791
        %v1171 = vunpack.c.l.b16 %v792
        %v1172 = vunpack.c.l.b16 %v793
        %v1173 = vpack.c.b16 %v1170, %v1169
        %v1174 = vpack.c.b16 %v1172, %v1171
        %1177 = vmatprep.subr.bf16.mxu0 0
        %1178 = vmatpush1.bf16.msra.mxu0 %v1173
        %1179 = vmatprep.subr.bf16.mxu0 0
        %1180 = vmatpush1.bf16.msra.mxu0 %v1174
        %1181 = vmatprep.subr.bf16.mxu0 0
        %1182 = vmatpush1.bf16.msra.mxu0 0
        %1183 = vmatprep.subr.bf16.mxu0 0
        %1184 = vmatpush1.bf16.msra.mxu0 0
        %1185 = vmatprep.subr.bf16.mxu0 0
        %1186 = vmatpush1.bf16.msra.mxu0 0
        %1187 = vmatprep.subr.bf16.mxu0 0
        %1188 = vmatpush1.bf16.msra.mxu0 0
        %1189 = vmatprep.subr.bf16.mxu0 0
        %1190 = vmatpush1.bf16.msra.mxu0 0
        %1191 = vmatprep.subr.bf16.mxu0 0
        %1192 = vmatpush1.bf16.msra.mxu0 0
        %1193 = vmatprep.subr.bf16.mxu0 0
        %1194 = vmatpush1.bf16.msra.mxu0 0
        %1195 = vmatprep.subr.bf16.mxu0 0
        %1196 = vmatpush1.bf16.msra.mxu0 0
        %1197 = vmatprep.subr.bf16.mxu0 0
        %1198 = vmatpush1.bf16.msra.mxu0 0
        %1199 = vmatprep.subr.bf16.mxu0 0
        %1200 = vmatpush1.bf16.msra.mxu0 0
        %1201 = vmatprep.subr.bf16.mxu0 0
        %1202 = vmatpush1.bf16.msra.mxu0 0
        %1203 = vmatprep.subr.bf16.mxu0 0
        %1204 = vmatpush1.bf16.msra.mxu0 0
        %1205 = vmatprep.subr.bf16.mxu0 0
        %1206 = vmatpush1.bf16.msra.mxu0 0
        %1207 = vmatprep.subr.bf16.mxu0 0
        %1208 = vmatpush1.bf16.msra.mxu0 0
        %1209 = vmatprep.mubr.bf16.mxu0 0
        %1210 = vmatmul.mubr.bf16.gmra.mrb[0].mxu0 %v915
        %v1211 = vpop.f32.mrb[0].mxu0
        %v1212 = vadd.f32 %v865, %v1211
        %v1213 = vpop.f32.mrb[0].mxu0
        %v1214 = vpop.f32.mrb[0].mxu0
        %v1215 = vpop.f32.mrb[0].mxu0
        %1216 = vdwg.mxu0
        %v1221 = vunpack.c.l.b16 %v794
        %v1222 = vunpack.c.l.b16 %v795
        %v1223 = vunpack.c.l.b16 %v796
        %v1224 = vunpack.c.l.b16 %v797
        %v1225 = vpack.c.b16 %v1222, %v1221
        %v1226 = vpack.c.b16 %v1224, %v1223
        %1229 = vmatprep.subr.bf16.mxu0 0
        %1230 = vmatpush1.bf16.msra.mxu0 %v1225
        %1231 = vmatprep.subr.bf16.mxu0 0
        %1232 = vmatpush1.bf16.msra.mxu0 %v1226
        %1233 = vmatprep.subr.bf16.mxu0 0
        %1234 = vmatpush1.bf16.msra.mxu0 0
        %1235 = vmatprep.subr.bf16.mxu0 0
        %1236 = vmatpush1.bf16.msra.mxu0 0
        %1237 = vmatprep.subr.bf16.mxu0 0
        %1238 = vmatpush1.bf16.msra.mxu0 0
        %1239 = vmatprep.subr.bf16.mxu0 0
        %1240 = vmatpush1.bf16.msra.mxu0 0
        %1241 = vmatprep.subr.bf16.mxu0 0
        %1242 = vmatpush1.bf16.msra.mxu0 0
        %1243 = vmatprep.subr.bf16.mxu0 0
        %1244 = vmatpush1.bf16.msra.mxu0 0
        %1245 = vmatprep.subr.bf16.mxu0 0
        %1246 = vmatpush1.bf16.msra.mxu0 0
        %1247 = vmatprep.subr.bf16.mxu0 0
        %1248 = vmatpush1.bf16.msra.mxu0 0
        %1249 = vmatprep.subr.bf16.mxu0 0
        %1250 = vmatpush1.bf16.msra.mxu0 0
        %1251 = vmatprep.subr.bf16.mxu0 0
        %1252 = vmatpush1.bf16.msra.mxu0 0
        %1253 = vmatprep.subr.bf16.mxu0 0
        %1254 = vmatpush1.bf16.msra.mxu0 0
        %1255 = vmatprep.subr.bf16.mxu0 0
        %1256 = vmatpush1.bf16.msra.mxu0 0
        %1257 = vmatprep.subr.bf16.mxu0 0
        %1258 = vmatpush1.bf16.msra.mxu0 0
        %1259 = vmatprep.subr.bf16.mxu0 0
        %1260 = vmatpush1.bf16.msra.mxu0 0
        %1261 = vmatprep.mubr.bf16.mxu0 0
        %1262 = vmatmul.mubr.bf16.gmra.mrb[0].mxu0 %v915
        %v1263 = vpop.f32.mrb[0].mxu0
        %v1264 = vadd.f32 %v869, %v1263
        %v1265 = vpop.f32.mrb[0].mxu0
        %v1266 = vpop.f32.mrb[0].mxu0
        %v1267 = vpop.f32.mrb[0].mxu0
        %1268 = vdwg.mxu0
        %v1273 = vunpack.c.l.b16 %v798
        %v1274 = vunpack.c.l.b16 %v799
        %v1275 = vunpack.c.l.b16 %v800
        %v1276 = vunpack.c.l.b16 %v801
        %v1277 = vpack.c.b16 %v1274, %v1273
        %v1278 = vpack.c.b16 %v1276, %v1275
        %1281 = vmatprep.subr.bf16.mxu0 0
        %1282 = vmatpush1.bf16.msra.mxu0 %v1277
        %1283 = vmatprep.subr.bf16.mxu0 0
        %1284 = vmatpush1.bf16.msra.mxu0 %v1278
        %1285 = vmatprep.subr.bf16.mxu0 0
        %1286 = vmatpush1.bf16.msra.mxu0 0
        %1287 = vmatprep.subr.bf16.mxu0 0
        %1288 = vmatpush1.bf16.msra.mxu0 0
        %1289 = vmatprep.subr.bf16.mxu0 0
        %1290 = vmatpush1.bf16.msra.mxu0 0
        %1291 = vmatprep.subr.bf16.mxu0 0
        %1292 = vmatpush1.bf16.msra.mxu0 0
        %1293 = vmatprep.subr.bf16.mxu0 0
        %1294 = vmatpush1.bf16.msra.mxu0 0
        %1295 = vmatprep.subr.bf16.mxu0 0
        %1296 = vmatpush1.bf16.msra.mxu0 0
        %1297 = vmatprep.subr.bf16.mxu0 0
        %1298 = vmatpush1.bf16.msra.mxu0 0
        %1299 = vmatprep.subr.bf16.mxu0 0
        %1300 = vmatpush1.bf16.msra.mxu0 0
        %1301 = vmatprep.subr.bf16.mxu0 0
        %1302 = vmatpush1.bf16.msra.mxu0 0
        %1303 = vmatprep.subr.bf16.mxu0 0
        %1304 = vmatpush1.bf16.msra.mxu0 0
        %1305 = vmatprep.subr.bf16.mxu0 0
        %1306 = vmatpush1.bf16.msra.mxu0 0
        %1307 = vmatprep.subr.bf16.mxu0 0
        %1308 = vmatpush1.bf16.msra.mxu0 0
        %1309 = vmatprep.subr.bf16.mxu0 0
        %1310 = vmatpush1.bf16.msra.mxu0 0
        %1311 = vmatprep.subr.bf16.mxu0 0
        %1312 = vmatpush1.bf16.msra.mxu0 0
        %1313 = vmatprep.mubr.bf16.mxu0 0
        %1314 = vmatmul.mubr.bf16.gmra.mrb[0].mxu0 %v915
        %v1315 = vpop.f32.mrb[0].mxu0
        %v1316 = vadd.f32 %v873, %v1315
        %v1317 = vpop.f32.mrb[0].mxu0
        %v1318 = vpop.f32.mrb[0].mxu0
        %v1319 = vpop.f32.mrb[0].mxu0
        %1320 = vdwg.mxu0
        %v1325 = vunpack.c.l.b16 %v802
        %v1326 = vunpack.c.l.b16 %v803
        %v1327 = vunpack.c.l.b16 %v804
        %v1328 = vunpack.c.l.b16 %v805
        %v1329 = vpack.c.b16 %v1326, %v1325
        %v1330 = vpack.c.b16 %v1328, %v1327
        %1333 = vmatprep.subr.bf16.mxu0 0
        %1334 = vmatpush1.bf16.msra.mxu0 %v1329
        %1335 = vmatprep.subr.bf16.mxu0 0
        %1336 = vmatpush1.bf16.msra.mxu0 %v1330
        %1337 = vmatprep.subr.bf16.mxu0 0
        %1338 = vmatpush1.bf16.msra.mxu0 0
        %1339 = vmatprep.subr.bf16.mxu0 0
        %1340 = vmatpush1.bf16.msra.mxu0 0
        %1341 = vmatprep.subr.bf16.mxu0 0
        %1342 = vmatpush1.bf16.msra.mxu0 0
        %1343 = vmatprep.subr.bf16.mxu0 0
        %1344 = vmatpush1.bf16.msra.mxu0 0
        %1345 = vmatprep.subr.bf16.mxu0 0
        %1346 = vmatpush1.bf16.msra.mxu0 0
        %1347 = vmatprep.subr.bf16.mxu0 0
        %1348 = vmatpush1.bf16.msra.mxu0 0
        %1349 = vmatprep.subr.bf16.mxu0 0
        %1350 = vmatpush1.bf16.msra.mxu0 0
        %1351 = vmatprep.subr.bf16.mxu0 0
        %1352 = vmatpush1.bf16.msra.mxu0 0
        %1353 = vmatprep.subr.bf16.mxu0 0
        %1354 = vmatpush1.bf16.msra.mxu0 0
        %1355 = vmatprep.subr.bf16.mxu0 0
        %1356 = vmatpush1.bf16.msra.mxu0 0
        %1357 = vmatprep.subr.bf16.mxu0 0
        %1358 = vmatpush1.bf16.msra.mxu0 0
        %1359 = vmatprep.subr.bf16.mxu0 0
        %1360 = vmatpush1.bf16.msra.mxu0 0
        %1361 = vmatprep.subr.bf16.mxu0 0
        %1362 = vmatpush1.bf16.msra.mxu0 0
        %1363 = vmatprep.subr.bf16.mxu0 0
        %1364 = vmatpush1.bf16.msra.mxu0 0
        %1365 = vmatprep.mubr.bf16.mxu0 0
        %1366 = vmatmul.mubr.bf16.gmra.mrb[0].mxu0 %v915
        %v1367 = vpop.f32.mrb[0].mxu0
        %v1368 = vadd.f32 %v877, %v1367
        %v1369 = vpop.f32.mrb[0].mxu0
        %v1370 = vpop.f32.mrb[0].mxu0
        %v1371 = vpop.f32.mrb[0].mxu0
        %1372 = vdwg.mxu0
        %v1377 = vunpack.c.l.b16 %v806
        %v1378 = vunpack.c.l.b16 %v807
        %v1379 = vunpack.c.l.b16 %v808
        %v1380 = vunpack.c.l.b16 %v809
        %v1381 = vpack.c.b16 %v1378, %v1377
        %v1382 = vpack.c.b16 %v1380, %v1379
        %1385 = vmatprep.subr.bf16.mxu0 0
        %1386 = vmatpush1.bf16.msra.mxu0 %v1381
        %1387 = vmatprep.subr.bf16.mxu0 0
        %1388 = vmatpush1.bf16.msra.mxu0 %v1382
        %1389 = vmatprep.subr.bf16.mxu0 0
        %1390 = vmatpush1.bf16.msra.mxu0 0
        %1391 = vmatprep.subr.bf16.mxu0 0
        %1392 = vmatpush1.bf16.msra.mxu0 0
        %1393 = vmatprep.subr.bf16.mxu0 0
        %1394 = vmatpush1.bf16.msra.mxu0 0
        %1395 = vmatprep.subr.bf16.mxu0 0
        %1396 = vmatpush1.bf16.msra.mxu0 0
        %1397 = vmatprep.subr.bf16.mxu0 0
        %1398 = vmatpush1.bf16.msra.mxu0 0
        %1399 = vmatprep.subr.bf16.mxu0 0
        %1400 = vmatpush1.bf16.msra.mxu0 0
        %1401 = vmatprep.subr.bf16.mxu0 0
        %1402 = vmatpush1.bf16.msra.mxu0 0
        %1403 = vmatprep.subr.bf16.mxu0 0
        %1404 = vmatpush1.bf16.msra.mxu0 0
        %1405 = vmatprep.subr.bf16.mxu0 0
        %1406 = vmatpush1.bf16.msra.mxu0 0
        %1407 = vmatprep.subr.bf16.mxu0 0
        %1408 = vmatpush1.bf16.msra.mxu0 0
        %1409 = vmatprep.subr.bf16.mxu0 0
        %1410 = vmatpush1.bf16.msra.mxu0 0
        %1411 = vmatprep.subr.bf16.mxu0 0
        %1412 = vmatpush1.bf16.msra.mxu0 0
        %1413 = vmatprep.subr.bf16.mxu0 0
        %1414 = vmatpush1.bf16.msra.mxu0 0
        %1415 = vmatprep.subr.bf16.mxu0 0
        %1416 = vmatpush1.bf16.msra.mxu0 0
        %1417 = vmatprep.mubr.bf16.mxu0 0
        %1418 = vmatmul.mubr.bf16.gmra.mrb[0].mxu0 %v915
        %v1419 = vpop.f32.mrb[0].mxu0
        %v1420 = vadd.f32 %v881, %v1419
        %v1421 = vpop.f32.mrb[0].mxu0
        %v1422 = vpop.f32.mrb[0].mxu0
        %v1423 = vpop.f32.mrb[0].mxu0
        %1424 = vdwg.mxu0
        %v1429 = vunpack.c.l.b16 %v810
        %v1430 = vunpack.c.l.b16 %v811
        %v1431 = vunpack.c.l.b16 %v812
        %v1432 = vunpack.c.l.b16 %v813
        %v1433 = vpack.c.b16 %v1430, %v1429
        %v1434 = vpack.c.b16 %v1432, %v1431
        %1437 = vmatprep.subr.bf16.mxu0 0
        %1438 = vmatpush1.bf16.msra.mxu0 %v1433
        %1439 = vmatprep.subr.bf16.mxu0 0
        %1440 = vmatpush1.bf16.msra.mxu0 %v1434
        %1441 = vmatprep.subr.bf16.mxu0 0
        %1442 = vmatpush1.bf16.msra.mxu0 0
        %1443 = vmatprep.subr.bf16.mxu0 0
        %1444 = vmatpush1.bf16.msra.mxu0 0
        %1445 = vmatprep.subr.bf16.mxu0 0
        %1446 = vmatpush1.bf16.msra.mxu0 0
        %1447 = vmatprep.subr.bf16.mxu0 0
        %1448 = vmatpush1.bf16.msra.mxu0 0
        %1449 = vmatprep.subr.bf16.mxu0 0
        %1450 = vmatpush1.bf16.msra.mxu0 0
        %1451 = vmatprep.subr.bf16.mxu0 0
        %1452 = vmatpush1.bf16.msra.mxu0 0
        %1453 = vmatprep.subr.bf16.mxu0 0
        %1454 = vmatpush1.bf16.msra.mxu0 0
        %1455 = vmatprep.subr.bf16.mxu0 0
        %1456 = vmatpush1.bf16.msra.mxu0 0
        %1457 = vmatprep.subr.bf16.mxu0 0
        %1458 = vmatpush1.bf16.msra.mxu0 0
        %1459 = vmatprep.subr.bf16.mxu0 0
        %1460 = vmatpush1.bf16.msra.mxu0 0
        %1461 = vmatprep.subr.bf16.mxu0 0
        %1462 = vmatpush1.bf16.msra.mxu0 0
        %1463 = vmatprep.subr.bf16.mxu0 0
        %1464 = vmatpush1.bf16.msra.mxu0 0
        %1465 = vmatprep.subr.bf16.mxu0 0
        %1466 = vmatpush1.bf16.msra.mxu0 0
        %1467 = vmatprep.subr.bf16.mxu0 0
        %1468 = vmatpush1.bf16.msra.mxu0 0
        %1469 = vmatprep.mubr.bf16.mxu0 0
        %1470 = vmatmul.mubr.bf16.gmra.mrb[0].mxu0 %v915
        %v1471 = vpop.f32.mrb[0].mxu0
        %v1472 = vadd.f32 %v885, %v1471
        %v1473 = vpop.f32.mrb[0].mxu0
        %v1474 = vpop.f32.mrb[0].mxu0
        %v1475 = vpop.f32.mrb[0].mxu0
        %1476 = vdwg.mxu0
        %v1481 = vunpack.c.l.b16 %v814
        %v1482 = vunpack.c.l.b16 %v815
        %v1483 = vunpack.c.l.b16 %v816
        %v1484 = vunpack.c.l.b16 %v817
        %v1485 = vpack.c.b16 %v1482, %v1481
        %v1486 = vpack.c.b16 %v1484, %v1483
        %1489 = vmatprep.subr.bf16.mxu0 0
        %1490 = vmatpush1.bf16.msra.mxu0 %v1485
        %1491 = vmatprep.subr.bf16.mxu0 0
        %1492 = vmatpush1.bf16.msra.mxu0 %v1486
        %1493 = vmatprep.subr.bf16.mxu0 0
        %1494 = vmatpush1.bf16.msra.mxu0 0
        %1495 = vmatprep.subr.bf16.mxu0 0
        %1496 = vmatpush1.bf16.msra.mxu0 0
        %1497 = vmatprep.subr.bf16.mxu0 0
        %1498 = vmatpush1.bf16.msra.mxu0 0
        %1499 = vmatprep.subr.bf16.mxu0 0
        %1500 = vmatpush1.bf16.msra.mxu0 0
        %1501 = vmatprep.subr.bf16.mxu0 0
        %1502 = vmatpush1.bf16.msra.mxu0 0
        %1503 = vmatprep.subr.bf16.mxu0 0
        %1504 = vmatpush1.bf16.msra.mxu0 0
        %1505 = vmatprep.subr.bf16.mxu0 0
        %1506 = vmatpush1.bf16.msra.mxu0 0
        %1507 = vmatprep.subr.bf16.mxu0 0
        %1508 = vmatpush1.bf16.msra.mxu0 0
        %1509 = vmatprep.subr.bf16.mxu0 0
        %1510 = vmatpush1.bf16.msra.mxu0 0
        %1511 = vmatprep.subr.bf16.mxu0 0
        %1512 = vmatpush1.bf16.msra.mxu0 0
        %1513 = vmatprep.subr.bf16.mxu0 0
        %1514 = vmatpush1.bf16.msra.mxu0 0
        %1515 = vmatprep.subr.bf16.mxu0 0
        %1516 = vmatpush1.bf16.msra.mxu0 0
        %1517 = vmatprep.subr.bf16.mxu0 0
        %1518 = vmatpush1.bf16.msra.mxu0 0
        %1519 = vmatprep.subr.bf16.mxu0 0
        %1520 = vmatpush1.bf16.msra.mxu0 0
        %1521 = vmatprep.mubr.bf16.mxu0 0
        %1522 = vmatmul.mubr.bf16.gmra.mrb[0].mxu0 %v915
        %v1523 = vpop.f32.mrb[0].mxu0
        %v1524 = vadd.f32 %v889, %v1523
        %v1525 = vpop.f32.mrb[0].mxu0
        %v1526 = vpop.f32.mrb[0].mxu0
        %v1527 = vpop.f32.mrb[0].mxu0
        %1528 = vdwg.mxu0
        %v1529 = vpack.c.bf16 %v952, %v952
        %v1530 = vpack.c.bf16 %v1004, %v1004
        %v1531 = vpack.c.bf16 %v1056, %v1056
        %v1532 = vpack.c.bf16 %v1108, %v1108
        %v1533 = vpack.c.bf16 %v1160, %v1160
        %v1534 = vpack.c.bf16 %v1212, %v1212
        %v1535 = vpack.c.bf16 %v1264, %v1264
        %v1536 = vpack.c.bf16 %v1316, %v1316
        %vm1537 = vcmask 64512
        %v1539 = vsel %vm1537, %v1529, 0
        %v1542 = vsel %vm1537, %v1533, 0
        %1544 = vmatprep.subr.bf16.mxu0 0
        %1545 = vmatpush1.bf16.xpose.msra.mxu0 %v1542
        %1546 = vmatprep.subr.bf16.mxu0 0
        %1547 = vmatpush1.bf16.xpose.msra.mxu0 0
        %1548 = vmatprep.subr.bf16.mxu0 0
        %1549 = vmatpush1.bf16.xpose.msra.mxu0 0
        %1550 = vmatprep.subr.bf16.mxu0 0
        %1551 = vmatpush1.bf16.xpose.msra.mxu0 0
        %1552 = vmatprep.subr.bf16.mxu0 0
        %1553 = vmatpush1.bf16.xpose.msra.mxu0 0
        %1554 = vmatprep.subr.bf16.mxu0 0
        %1555 = vmatpush1.bf16.xpose.msra.mxu0 0
        %1556 = vmatprep.subr.bf16.mxu0 0
        %1557 = vmatpush1.bf16.xpose.msra.mxu0 0
        %1558 = vmatprep.subr.bf16.mxu0 0
        %1559 = vmatpush1.bf16.xpose.msra.mxu0 0
        %1560 = vmatprep.subr.bf16.mxu0 0
        %1561 = vmatpush1.bf16.xpose.msra.mxu0 0
        %1562 = vmatprep.subr.bf16.mxu0 0
        %1563 = vmatpush1.bf16.xpose.msra.mxu0 0
        %1564 = vmatprep.subr.bf16.mxu0 0
        %1565 = vmatpush1.bf16.xpose.msra.mxu0 0
        %1566 = vmatprep.subr.bf16.mxu0 0
        %1567 = vmatpush1.bf16.xpose.msra.mxu0 0
        %1568 = vmatprep.subr.bf16.mxu0 0
        %1569 = vmatpush1.bf16.xpose.msra.mxu0 0
        %1570 = vmatprep.subr.bf16.mxu0 0
        %1571 = vmatpush1.bf16.xpose.msra.mxu0 0
        %1572 = vmatprep.subr.bf16.mxu0 0
        %1573 = vmatpush1.bf16.xpose.msra.mxu0 0
        %1574 = vmatprep.subr.bf16.mxu0 0
        %1575 = vmatpush1.bf16.xpose.msra.mxu0 0
        %1576 = vmatprep.mubr.bf16.mxu0 0
        %1577 = vmatmul.mubr.bf16.gmra.mrb[0].mxu0 %v1539
        %v1578 = vpop.f32.mrb[0].mxu0
        %v1579 = vadd.f32 0.0, %v1578
        %v1580 = vpop.f32.mrb[0].mxu0
        %v1581 = vpop.f32.mrb[0].mxu0
        %v1582 = vpop.f32.mrb[0].mxu0
        %1583 = vdwg.mxu0
        %v1585 = vsel %vm1537, %v1530, 0
        %v1588 = vsel %vm1537, %v1534, 0
        %1590 = vmatprep.subr.bf16.mxu0 0
        %1591 = vmatpush1.bf16.xpose.msra.mxu0 %v1588
        %1592 = vmatprep.subr.bf16.mxu0 0
        %1593 = vmatpush1.bf16.xpose.msra.mxu0 0
        %1594 = vmatprep.subr.bf16.mxu0 0
        %1595 = vmatpush1.bf16.xpose.msra.mxu0 0
        %1596 = vmatprep.subr.bf16.mxu0 0
        %1597 = vmatpush1.bf16.xpose.msra.mxu0 0
        %1598 = vmatprep.subr.bf16.mxu0 0
        %1599 = vmatpush1.bf16.xpose.msra.mxu0 0
        %1600 = vmatprep.subr.bf16.mxu0 0
        %1601 = vmatpush1.bf16.xpose.msra.mxu0 0
        %1602 = vmatprep.subr.bf16.mxu0 0
        %1603 = vmatpush1.bf16.xpose.msra.mxu0 0
        %1604 = vmatprep.subr.bf16.mxu0 0
        %1605 = vmatpush1.bf16.xpose.msra.mxu0 0
        %1606 = vmatprep.subr.bf16.mxu0 0
        %1607 = vmatpush1.bf16.xpose.msra.mxu0 0
        %1608 = vmatprep.subr.bf16.mxu0 0
        %1609 = vmatpush1.bf16.xpose.msra.mxu0 0
        %1610 = vmatprep.subr.bf16.mxu0 0
        %1611 = vmatpush1.bf16.xpose.msra.mxu0 0
        %1612 = vmatprep.subr.bf16.mxu0 0
        %1613 = vmatpush1.bf16.xpose.msra.mxu0 0
        %1614 = vmatprep.subr.bf16.mxu0 0
        %1615 = vmatpush1.bf16.xpose.msra.mxu0 0
        %1616 = vmatprep.subr.bf16.mxu0 0
        %1617 = vmatpush1.bf16.xpose.msra.mxu0 0
        %1618 = vmatprep.subr.bf16.mxu0 0
        %1619 = vmatpush1.bf16.xpose.msra.mxu0 0
        %1620 = vmatprep.subr.bf16.mxu0 0
        %1621 = vmatpush1.bf16.xpose.msra.mxu0 0
        %1622 = vmatprep.mubr.bf16.mxu0 0
        %1623 = vmatmul.mubr.bf16.gmra.mrb[0].mxu0 %v1585
        %v1624 = vpop.f32.mrb[0].mxu0
        %v1625 = vadd.f32 0.0, %v1624
        %v1626 = vpop.f32.mrb[0].mxu0
        %v1627 = vpop.f32.mrb[0].mxu0
        %v1628 = vpop.f32.mrb[0].mxu0
        %1629 = vdwg.mxu0
        %v1631 = vsel %vm1537, %v1531, 0
        %v1634 = vsel %vm1537, %v1535, 0
        %1636 = vmatprep.subr.bf16.mxu0 0
        %1637 = vmatpush1.bf16.xpose.msra.mxu0 %v1634
        %1638 = vmatprep.subr.bf16.mxu0 0
        %1639 = vmatpush1.bf16.xpose.msra.mxu0 0
        %1640 = vmatprep.subr.bf16.mxu0 0
        %1641 = vmatpush1.bf16.xpose.msra.mxu0 0
        %1642 = vmatprep.subr.bf16.mxu0 0
        %1643 = vmatpush1.bf16.xpose.msra.mxu0 0
        %1644 = vmatprep.subr.bf16.mxu0 0
        %1645 = vmatpush1.bf16.xpose.msra.mxu0 0
        %1646 = vmatprep.subr.bf16.mxu0 0
        %1647 = vmatpush1.bf16.xpose.msra.mxu0 0
        %1648 = vmatprep.subr.bf16.mxu0 0
        %1649 = vmatpush1.bf16.xpose.msra.mxu0 0
        %1650 = vmatprep.subr.bf16.mxu0 0
        %1651 = vmatpush1.bf16.xpose.msra.mxu0 0
        %1652 = vmatprep.subr.bf16.mxu0 0
        %1653 = vmatpush1.bf16.xpose.msra.mxu0 0
        %1654 = vmatprep.subr.bf16.mxu0 0
        %1655 = vmatpush1.bf16.xpose.msra.mxu0 0
        %1656 = vmatprep.subr.bf16.mxu0 0
        %1657 = vmatpush1.bf16.xpose.msra.mxu0 0
        %1658 = vmatprep.subr.bf16.mxu0 0
        %1659 = vmatpush1.bf16.xpose.msra.mxu0 0
        %1660 = vmatprep.subr.bf16.mxu0 0
        %1661 = vmatpush1.bf16.xpose.msra.mxu0 0
        %1662 = vmatprep.subr.bf16.mxu0 0
        %1663 = vmatpush1.bf16.xpose.msra.mxu0 0
        %1664 = vmatprep.subr.bf16.mxu0 0
        %1665 = vmatpush1.bf16.xpose.msra.mxu0 0
        %1666 = vmatprep.subr.bf16.mxu0 0
        %1667 = vmatpush1.bf16.xpose.msra.mxu0 0
        %1668 = vmatprep.mubr.bf16.mxu0 0
        %1669 = vmatmul.mubr.bf16.gmra.mrb[0].mxu0 %v1631
        %v1670 = vpop.f32.mrb[0].mxu0
        %v1671 = vadd.f32 0.0, %v1670
        %v1672 = vpop.f32.mrb[0].mxu0
        %v1673 = vpop.f32.mrb[0].mxu0
        %v1674 = vpop.f32.mrb[0].mxu0
        %1675 = vdwg.mxu0
        %v1677 = vsel %vm1537, %v1532, 0
        %v1680 = vsel %vm1537, %v1536, 0
        %1682 = vmatprep.subr.bf16.mxu0 0
        %1683 = vmatpush1.bf16.xpose.msra.mxu0 %v1680
        %1684 = vmatprep.subr.bf16.mxu0 0
        %1685 = vmatpush1.bf16.xpose.msra.mxu0 0
        %1686 = vmatprep.subr.bf16.mxu0 0
        %1687 = vmatpush1.bf16.xpose.msra.mxu0 0
        %1688 = vmatprep.subr.bf16.mxu0 0
        %1689 = vmatpush1.bf16.xpose.msra.mxu0 0
        %1690 = vmatprep.subr.bf16.mxu0 0
        %1691 = vmatpush1.bf16.xpose.msra.mxu0 0
        %1692 = vmatprep.subr.bf16.mxu0 0
        %1693 = vmatpush1.bf16.xpose.msra.mxu0 0
        %1694 = vmatprep.subr.bf16.mxu0 0
        %1695 = vmatpush1.bf16.xpose.msra.mxu0 0
        %1696 = vmatprep.subr.bf16.mxu0 0
        %1697 = vmatpush1.bf16.xpose.msra.mxu0 0
        %1698 = vmatprep.subr.bf16.mxu0 0
        %1699 = vmatpush1.bf16.xpose.msra.mxu0 0
        %1700 = vmatprep.subr.bf16.mxu0 0
        %1701 = vmatpush1.bf16.xpose.msra.mxu0 0
        %1702 = vmatprep.subr.bf16.mxu0 0
        %1703 = vmatpush1.bf16.xpose.msra.mxu0 0
        %1704 = vmatprep.subr.bf16.mxu0 0
        %1705 = vmatpush1.bf16.xpose.msra.mxu0 0
        %1706 = vmatprep.subr.bf16.mxu0 0
        %1707 = vmatpush1.bf16.xpose.msra.mxu0 0
        %1708 = vmatprep.subr.bf16.mxu0 0
        %1709 = vmatpush1.bf16.xpose.msra.mxu0 0
        %1710 = vmatprep.subr.bf16.mxu0 0
        %1711 = vmatpush1.bf16.xpose.msra.mxu0 0
        %1712 = vmatprep.subr.bf16.mxu0 0
        %1713 = vmatpush1.bf16.xpose.msra.mxu0 0
        %1714 = vmatprep.mubr.bf16.mxu0 0
        %1715 = vmatmul.mubr.bf16.gmra.mrb[0].mxu0 %v1677
        %v1716 = vpop.f32.mrb[0].mxu0
        %v1717 = vadd.f32 0.0, %v1716
        %v1718 = vpop.f32.mrb[0].mxu0
        %v1719 = vpop.f32.mrb[0].mxu0
        %v1720 = vpop.f32.mrb[0].mxu0
        %1721 = vdwg.mxu0
        %v1722 = vsel %vm737, 1, 0
        %vm1723 = vcmp.eq.s32.totalorder %v1722, 1
        %v1724 = vsel %vm1723, %v1579, -1e+30
        %v1725 = vsel %vm1723, %v1625, -1e+30
        %v1726 = vsel %vm1723, %v1671, -1e+30
        %v1727 = vsel %vm1723, %v1717, -1e+30
        %v1728 = vsel %vm1537, %v1724, -inf
        %1729 = vmax.xlane.f32.xlu0 %v1728
        %v1730 = vpop.xlane.xlu0 %1729
        %v1731 = vsel %vm1537, %v1725, -inf
        %1732 = vmax.xlane.f32.xlu0 %v1731
        %v1733 = vpop.xlane.xlu0 %1732
        %v1734 = vsel %vm1537, %v1726, -inf
        %1735 = vmax.xlane.f32.xlu0 %v1734
        %v1736 = vpop.xlane.xlu0 %1735
        %v1737 = vsel %vm1537, %v1727, -inf
        %1738 = vmax.xlane.f32.xlu0 %v1737
        %v1739 = vpop.xlane.xlu0 %1738
        %v1740 = vsub.f32 %v1724, %v1730
        %v1741 = vsub.f32 %v1725, %v1733
        %v1742 = vsub.f32 %v1726, %v1736
        %v1743 = vsub.f32 %v1727, %v1739
        %v1744 = vmul.f32 %v1740, 1.442695
        %v1745 = vpow.pop %v1744
        %v1746 = vmul.f32 %v1741, 1.442695
        %v1747 = vpow.pop %v1746
        %v1748 = vmul.f32 %v1742, 1.442695
        %v1749 = vpow.pop %v1748
        %v1750 = vmul.f32 %v1743, 1.442695
        %v1751 = vpow.pop %v1750
        %v1752 = vsel %vm1537, %v1745, 0.0
        %1753 = vadd.xlane.f32.xlu0 %v1752
        %v1754 = vpop.xlane.xlu0 %1753
        %v1755 = vsel %vm1537, %v1747, 0.0
        %1756 = vadd.xlane.f32.xlu0 %v1755
        %v1757 = vpop.xlane.xlu0 %1756
        %v1758 = vsel %vm1537, %v1749, 0.0
        %1759 = vadd.xlane.f32.xlu0 %v1758
        %v1760 = vpop.xlane.xlu0 %1759
        %v1761 = vsel %vm1537, %v1751, 0.0
        %1762 = vadd.xlane.f32.xlu0 %v1761
        %v1763 = vpop.xlane.xlu0 %1762
        %v1764 = vrcp.pop %v1754
        %v1765 = vmul.f32 %v1745, %v1764
        %v1766 = vrcp.pop %v1757
        %v1767 = vmul.f32 %v1747, %v1766
        %v1768 = vrcp.pop %v1760
        %v1769 = vmul.f32 %v1749, %v1768
        %v1770 = vrcp.pop %v1763
        %v1771 = vmul.f32 %v1751, %v1770
        %v1772 = vpack.c.bf16 %v1765, %v1765
        %v1773 = vpack.c.bf16 %v1767, %v1767
        %v1774 = vpack.c.bf16 %v1769, %v1769
        %v1775 = vpack.c.bf16 %v1771, %v1771
        %v1776 = vpack.c.bf16 %v1368, %v1368
        %v1777 = vpack.c.bf16 %v1420, %v1420
        %v1778 = vpack.c.bf16 %v1472, %v1472
        %v1779 = vpack.c.bf16 %v1524, %v1524
        %v1781 = vsel %vm1537, %v1772, 0
        %vm1783 = vcmask 1043456
        %v1785 = vsel %vm1783, %v1776, 0
        %1787 = vmatprep.subr.bf16.mxu0 0
        %1788 = vmatpush1.bf16.msra.mxu0 %v1785
        %1789 = vmatprep.subr.bf16.mxu0 0
        %1790 = vmatpush1.bf16.msra.mxu0 0
        %1791 = vmatprep.subr.bf16.mxu0 0
        %1792 = vmatpush1.bf16.msra.mxu0 0
        %1793 = vmatprep.subr.bf16.mxu0 0
        %1794 = vmatpush1.bf16.msra.mxu0 0
        %1795 = vmatprep.subr.bf16.mxu0 0
        %1796 = vmatpush1.bf16.msra.mxu0 0
        %1797 = vmatprep.subr.bf16.mxu0 0
        %1798 = vmatpush1.bf16.msra.mxu0 0
        %1799 = vmatprep.subr.bf16.mxu0 0
        %1800 = vmatpush1.bf16.msra.mxu0 0
        %1801 = vmatprep.subr.bf16.mxu0 0
        %1802 = vmatpush1.bf16.msra.mxu0 0
        %1803 = vmatprep.subr.bf16.mxu0 0
        %1804 = vmatpush1.bf16.msra.mxu0 0
        %1805 = vmatprep.subr.bf16.mxu0 0
        %1806 = vmatpush1.bf16.msra.mxu0 0
        %1807 = vmatprep.subr.bf16.mxu0 0
        %1808 = vmatpush1.bf16.msra.mxu0 0
        %1809 = vmatprep.subr.bf16.mxu0 0
        %1810 = vmatpush1.bf16.msra.mxu0 0
        %1811 = vmatprep.subr.bf16.mxu0 0
        %1812 = vmatpush1.bf16.msra.mxu0 0
        %1813 = vmatprep.subr.bf16.mxu0 0
        %1814 = vmatpush1.bf16.msra.mxu0 0
        %1815 = vmatprep.subr.bf16.mxu0 0
        %1816 = vmatpush1.bf16.msra.mxu0 0
        %1817 = vmatprep.subr.bf16.mxu0 0
        %1818 = vmatpush1.bf16.msra.mxu0 0
        %1819 = vmatprep.mubr.bf16.mxu0 0
        %1820 = vmatmul.mubr.bf16.gmra.mrb[0].mxu0 %v1781
        %v1821 = vpop.f32.mrb[0].mxu0
        %v1822 = vadd.f32 0.0, %v1821
        %v1823 = vpop.f32.mrb[0].mxu0
        %v1824 = vpop.f32.mrb[0].mxu0
        %v1825 = vpop.f32.mrb[0].mxu0
        %1826 = vdwg.mxu0
        %v1828 = vsel %vm1537, %v1773, 0
        %v1831 = vsel %vm1783, %v1777, 0
        %1833 = vmatprep.subr.bf16.mxu0 0
        %1834 = vmatpush1.bf16.msra.mxu0 %v1831
        %1835 = vmatprep.subr.bf16.mxu0 0
        %1836 = vmatpush1.bf16.msra.mxu0 0
        %1837 = vmatprep.subr.bf16.mxu0 0
        %1838 = vmatpush1.bf16.msra.mxu0 0
        %1839 = vmatprep.subr.bf16.mxu0 0
        %1840 = vmatpush1.bf16.msra.mxu0 0
        %1841 = vmatprep.subr.bf16.mxu0 0
        %1842 = vmatpush1.bf16.msra.mxu0 0
        %1843 = vmatprep.subr.bf16.mxu0 0
        %1844 = vmatpush1.bf16.msra.mxu0 0
        %1845 = vmatprep.subr.bf16.mxu0 0
        %1846 = vmatpush1.bf16.msra.mxu0 0
        %1847 = vmatprep.subr.bf16.mxu0 0
        %1848 = vmatpush1.bf16.msra.mxu0 0
        %1849 = vmatprep.subr.bf16.mxu0 0
        %1850 = vmatpush1.bf16.msra.mxu0 0
        %1851 = vmatprep.subr.bf16.mxu0 0
        %1852 = vmatpush1.bf16.msra.mxu0 0
        %1853 = vmatprep.subr.bf16.mxu0 0
        %1854 = vmatpush1.bf16.msra.mxu0 0
        %1855 = vmatprep.subr.bf16.mxu0 0
        %1856 = vmatpush1.bf16.msra.mxu0 0
        %1857 = vmatprep.subr.bf16.mxu0 0
        %1858 = vmatpush1.bf16.msra.mxu0 0
        %1859 = vmatprep.subr.bf16.mxu0 0
        %1860 = vmatpush1.bf16.msra.mxu0 0
        %1861 = vmatprep.subr.bf16.mxu0 0
        %1862 = vmatpush1.bf16.msra.mxu0 0
        %1863 = vmatprep.subr.bf16.mxu0 0
        %1864 = vmatpush1.bf16.msra.mxu0 0
        %1865 = vmatprep.mubr.bf16.mxu0 0
        %1866 = vmatmul.mubr.bf16.gmra.mrb[0].mxu0 %v1828
        %v1867 = vpop.f32.mrb[0].mxu0
        %v1868 = vadd.f32 0.0, %v1867
        %v1869 = vpop.f32.mrb[0].mxu0
        %v1870 = vpop.f32.mrb[0].mxu0
        %v1871 = vpop.f32.mrb[0].mxu0
        %1872 = vdwg.mxu0
        %v1874 = vsel %vm1537, %v1774, 0
        %v1877 = vsel %vm1783, %v1778, 0
        %1879 = vmatprep.subr.bf16.mxu0 0
        %1880 = vmatpush1.bf16.msra.mxu0 %v1877
        %1881 = vmatprep.subr.bf16.mxu0 0
        %1882 = vmatpush1.bf16.msra.mxu0 0
        %1883 = vmatprep.subr.bf16.mxu0 0
        %1884 = vmatpush1.bf16.msra.mxu0 0
        %1885 = vmatprep.subr.bf16.mxu0 0
        %1886 = vmatpush1.bf16.msra.mxu0 0
        %1887 = vmatprep.subr.bf16.mxu0 0
        %1888 = vmatpush1.bf16.msra.mxu0 0
        %1889 = vmatprep.subr.bf16.mxu0 0
        %1890 = vmatpush1.bf16.msra.mxu0 0
        %1891 = vmatprep.subr.bf16.mxu0 0
        %1892 = vmatpush1.bf16.msra.mxu0 0
        %1893 = vmatprep.subr.bf16.mxu0 0
        %1894 = vmatpush1.bf16.msra.mxu0 0
        %1895 = vmatprep.subr.bf16.mxu0 0
        %1896 = vmatpush1.bf16.msra.mxu0 0
        %1897 = vmatprep.subr.bf16.mxu0 0
        %1898 = vmatpush1.bf16.msra.mxu0 0
        %1899 = vmatprep.subr.bf16.mxu0 0
        %1900 = vmatpush1.bf16.msra.mxu0 0
        %1901 = vmatprep.subr.bf16.mxu0 0
        %1902 = vmatpush1.bf16.msra.mxu0 0
        %1903 = vmatprep.subr.bf16.mxu0 0
        %1904 = vmatpush1.bf16.msra.mxu0 0
        %1905 = vmatprep.subr.bf16.mxu0 0
        %1906 = vmatpush1.bf16.msra.mxu0 0
        %1907 = vmatprep.subr.bf16.mxu0 0
        %1908 = vmatpush1.bf16.msra.mxu0 0
        %1909 = vmatprep.subr.bf16.mxu0 0
        %1910 = vmatpush1.bf16.msra.mxu0 0
        %1911 = vmatprep.mubr.bf16.mxu0 0
        %1912 = vmatmul.mubr.bf16.gmra.mrb[0].mxu0 %v1874
        %v1913 = vpop.f32.mrb[0].mxu0
        %v1914 = vadd.f32 0.0, %v1913
        %v1915 = vpop.f32.mrb[0].mxu0
        %v1916 = vpop.f32.mrb[0].mxu0
        %v1917 = vpop.f32.mrb[0].mxu0
        %1918 = vdwg.mxu0
        %v1920 = vsel %vm1537, %v1775, 0
        %v1923 = vsel %vm1783, %v1779, 0
        %1925 = vmatprep.subr.bf16.mxu0 0
        %1926 = vmatpush1.bf16.msra.mxu0 %v1923
        %1927 = vmatprep.subr.bf16.mxu0 0
        %1928 = vmatpush1.bf16.msra.mxu0 0
        %1929 = vmatprep.subr.bf16.mxu0 0
        %1930 = vmatpush1.bf16.msra.mxu0 0
        %1931 = vmatprep.subr.bf16.mxu0 0
        %1932 = vmatpush1.bf16.msra.mxu0 0
        %1933 = vmatprep.subr.bf16.mxu0 0
        %1934 = vmatpush1.bf16.msra.mxu0 0
        %1935 = vmatprep.subr.bf16.mxu0 0
        %1936 = vmatpush1.bf16.msra.mxu0 0
        %1937 = vmatprep.subr.bf16.mxu0 0
        %1938 = vmatpush1.bf16.msra.mxu0 0
        %1939 = vmatprep.subr.bf16.mxu0 0
        %1940 = vmatpush1.bf16.msra.mxu0 0
        %1941 = vmatprep.subr.bf16.mxu0 0
        %1942 = vmatpush1.bf16.msra.mxu0 0
        %1943 = vmatprep.subr.bf16.mxu0 0
        %1944 = vmatpush1.bf16.msra.mxu0 0
        %1945 = vmatprep.subr.bf16.mxu0 0
        %1946 = vmatpush1.bf16.msra.mxu0 0
        %1947 = vmatprep.subr.bf16.mxu0 0
        %1948 = vmatpush1.bf16.msra.mxu0 0
        %1949 = vmatprep.subr.bf16.mxu0 0
        %1950 = vmatpush1.bf16.msra.mxu0 0
        %1951 = vmatprep.subr.bf16.mxu0 0
        %1952 = vmatpush1.bf16.msra.mxu0 0
        %1953 = vmatprep.subr.bf16.mxu0 0
        %1954 = vmatpush1.bf16.msra.mxu0 0
        %1955 = vmatprep.subr.bf16.mxu0 0
        %1956 = vmatpush1.bf16.msra.mxu0 0
        %1957 = vmatprep.mubr.bf16.mxu0 0
        %1958 = vmatmul.mubr.bf16.gmra.mrb[0].mxu0 %v1920
        %v1959 = vpop.f32.mrb[0].mxu0
        %v1960 = vadd.f32 0.0, %v1959
        %v1961 = vpop.f32.mrb[0].mxu0
        %v1962 = vpop.f32.mrb[0].mxu0
        %v1963 = vpop.f32.mrb[0].mxu0
        %1964 = vdwg.mxu0
        %v1965 = vpack.c.bf16 %v1822, %v1822
        %v1966 = vpack.c.bf16 %v1868, %v1868
        %v1967 = vpack.c.bf16 %v1914, %v1914
        %v1968 = vpack.c.bf16 %v1960, %v1960
        %v1969 = vld [vmem:[%s698] sm:$0xf]
        %v1970 = vld [vmem:[%s698 + $0x4] sm:$0xf]
        %v1971 = vld [vmem:[%s698 + $0x8] sm:$0xf]
        %v1972 = vld [vmem:[%s698 + $0xc] sm:$0xf]
        %v1974 = vsel %vm1537, %v1965, 0
        %v1977 = vsel %vm1783, %v1969, 0
        %1979 = vmatprep.subr.bf16.mxu0 0
        %1980 = vmatpush1.bf16.msra.mxu0 %v1977
        %1981 = vmatprep.subr.bf16.mxu0 0
        %1982 = vmatpush1.bf16.msra.mxu0 0
        %1983 = vmatprep.subr.bf16.mxu0 0
        %1984 = vmatpush1.bf16.msra.mxu0 0
        %1985 = vmatprep.subr.bf16.mxu0 0
        %1986 = vmatpush1.bf16.msra.mxu0 0
        %1987 = vmatprep.subr.bf16.mxu0 0
        %1988 = vmatpush1.bf16.msra.mxu0 0
        %1989 = vmatprep.subr.bf16.mxu0 0
        %1990 = vmatpush1.bf16.msra.mxu0 0
        %1991 = vmatprep.subr.bf16.mxu0 0
        %1992 = vmatpush1.bf16.msra.mxu0 0
        %1993 = vmatprep.subr.bf16.mxu0 0
        %1994 = vmatpush1.bf16.msra.mxu0 0
        %1995 = vmatprep.subr.bf16.mxu0 0
        %1996 = vmatpush1.bf16.msra.mxu0 0
        %1997 = vmatprep.subr.bf16.mxu0 0
        %1998 = vmatpush1.bf16.msra.mxu0 0
        %1999 = vmatprep.subr.bf16.mxu0 0
        %2000 = vmatpush1.bf16.msra.mxu0 0
        %2001 = vmatprep.subr.bf16.mxu0 0
        %2002 = vmatpush1.bf16.msra.mxu0 0
        %2003 = vmatprep.subr.bf16.mxu0 0
        %2004 = vmatpush1.bf16.msra.mxu0 0
        %2005 = vmatprep.subr.bf16.mxu0 0
        %2006 = vmatpush1.bf16.msra.mxu0 0
        %2007 = vmatprep.subr.bf16.mxu0 0
        %2008 = vmatpush1.bf16.msra.mxu0 0
        %2009 = vmatprep.subr.bf16.mxu0 0
        %2010 = vmatpush1.bf16.msra.mxu0 0
        %2011 = vmatprep.mubr.bf16.mxu0 0
        %2012 = vmatmul.mubr.bf16.gmra.mrb[0].mxu0 %v1974
        %v2013 = vpop.f32.mrb[0].mxu0
        %v2014 = vadd.f32 0.0, %v2013
        %v2015 = vpop.f32.mrb[0].mxu0
        %v2016 = vpop.f32.mrb[0].mxu0
        %v2017 = vpop.f32.mrb[0].mxu0
        %2018 = vdwg.mxu0
        %v2020 = vsel %vm1537, %v1966, 0
        %v2023 = vsel %vm1783, %v1970, 0
        %2025 = vmatprep.subr.bf16.mxu0 0
        %2026 = vmatpush1.bf16.msra.mxu0 %v2023
        %2027 = vmatprep.subr.bf16.mxu0 0
        %2028 = vmatpush1.bf16.msra.mxu0 0
        %2029 = vmatprep.subr.bf16.mxu0 0
        %2030 = vmatpush1.bf16.msra.mxu0 0
        %2031 = vmatprep.subr.bf16.mxu0 0
        %2032 = vmatpush1.bf16.msra.mxu0 0
        %2033 = vmatprep.subr.bf16.mxu0 0
        %2034 = vmatpush1.bf16.msra.mxu0 0
        %2035 = vmatprep.subr.bf16.mxu0 0
        %2036 = vmatpush1.bf16.msra.mxu0 0
        %2037 = vmatprep.subr.bf16.mxu0 0
        %2038 = vmatpush1.bf16.msra.mxu0 0
        %2039 = vmatprep.subr.bf16.mxu0 0
        %2040 = vmatpush1.bf16.msra.mxu0 0
        %2041 = vmatprep.subr.bf16.mxu0 0
        %2042 = vmatpush1.bf16.msra.mxu0 0
        %2043 = vmatprep.subr.bf16.mxu0 0
        %2044 = vmatpush1.bf16.msra.mxu0 0
        %2045 = vmatprep.subr.bf16.mxu0 0
        %2046 = vmatpush1.bf16.msra.mxu0 0
        %2047 = vmatprep.subr.bf16.mxu0 0
        %2048 = vmatpush1.bf16.msra.mxu0 0
        %2049 = vmatprep.subr.bf16.mxu0 0
        %2050 = vmatpush1.bf16.msra.mxu0 0
        %2051 = vmatprep.subr.bf16.mxu0 0
        %2052 = vmatpush1.bf16.msra.mxu0 0
        %2053 = vmatprep.subr.bf16.mxu0 0
        %2054 = vmatpush1.bf16.msra.mxu0 0
        %2055 = vmatprep.subr.bf16.mxu0 0
        %2056 = vmatpush1.bf16.msra.mxu0 0
        %2057 = vmatprep.mubr.bf16.mxu0 0
        %2058 = vmatmul.mubr.bf16.gmra.mrb[0].mxu0 %v2020
        %v2059 = vpop.f32.mrb[0].mxu0
        %v2060 = vadd.f32 0.0, %v2059
        %v2061 = vpop.f32.mrb[0].mxu0
        %v2062 = vpop.f32.mrb[0].mxu0
        %v2063 = vpop.f32.mrb[0].mxu0
        %2064 = vdwg.mxu0
        %v2066 = vsel %vm1537, %v1967, 0
        %v2069 = vsel %vm1783, %v1971, 0
        %2071 = vmatprep.subr.bf16.mxu0 0
        %2072 = vmatpush1.bf16.msra.mxu0 %v2069
        %2073 = vmatprep.subr.bf16.mxu0 0
        %2074 = vmatpush1.bf16.msra.mxu0 0
        %2075 = vmatprep.subr.bf16.mxu0 0
        %2076 = vmatpush1.bf16.msra.mxu0 0
        %2077 = vmatprep.subr.bf16.mxu0 0
        %2078 = vmatpush1.bf16.msra.mxu0 0
        %2079 = vmatprep.subr.bf16.mxu0 0
        %2080 = vmatpush1.bf16.msra.mxu0 0
        %2081 = vmatprep.subr.bf16.mxu0 0
        %2082 = vmatpush1.bf16.msra.mxu0 0
        %2083 = vmatprep.subr.bf16.mxu0 0
        %2084 = vmatpush1.bf16.msra.mxu0 0
        %2085 = vmatprep.subr.bf16.mxu0 0
        %2086 = vmatpush1.bf16.msra.mxu0 0
        %2087 = vmatprep.subr.bf16.mxu0 0
        %2088 = vmatpush1.bf16.msra.mxu0 0
        %2089 = vmatprep.subr.bf16.mxu0 0
        %2090 = vmatpush1.bf16.msra.mxu0 0
        %2091 = vmatprep.subr.bf16.mxu0 0
        %2092 = vmatpush1.bf16.msra.mxu0 0
        %2093 = vmatprep.subr.bf16.mxu0 0
        %2094 = vmatpush1.bf16.msra.mxu0 0
        %2095 = vmatprep.subr.bf16.mxu0 0
        %2096 = vmatpush1.bf16.msra.mxu0 0
        %2097 = vmatprep.subr.bf16.mxu0 0
        %2098 = vmatpush1.bf16.msra.mxu0 0
        %2099 = vmatprep.subr.bf16.mxu0 0
        %2100 = vmatpush1.bf16.msra.mxu0 0
        %2101 = vmatprep.subr.bf16.mxu0 0
        %2102 = vmatpush1.bf16.msra.mxu0 0
        %2103 = vmatprep.mubr.bf16.mxu0 0
        %2104 = vmatmul.mubr.bf16.gmra.mrb[0].mxu0 %v2066
        %v2105 = vpop.f32.mrb[0].mxu0
        %v2106 = vadd.f32 0.0, %v2105
        %v2107 = vpop.f32.mrb[0].mxu0
        %v2108 = vpop.f32.mrb[0].mxu0
        %v2109 = vpop.f32.mrb[0].mxu0
        %2110 = vdwg.mxu0
        %v2112 = vsel %vm1537, %v1968, 0
        %v2115 = vsel %vm1783, %v1972, 0
        %2117 = vmatprep.subr.bf16.mxu0 0
        %2118 = vmatpush1.bf16.msra.mxu0 %v2115
        %2119 = vmatprep.subr.bf16.mxu0 0
        %2120 = vmatpush1.bf16.msra.mxu0 0
        %2121 = vmatprep.subr.bf16.mxu0 0
        %2122 = vmatpush1.bf16.msra.mxu0 0
        %2123 = vmatprep.subr.bf16.mxu0 0
        %2124 = vmatpush1.bf16.msra.mxu0 0
        %2125 = vmatprep.subr.bf16.mxu0 0
        %2126 = vmatpush1.bf16.msra.mxu0 0
        %2127 = vmatprep.subr.bf16.mxu0 0
        %2128 = vmatpush1.bf16.msra.mxu0 0
        %2129 = vmatprep.subr.bf16.mxu0 0
        %2130 = vmatpush1.bf16.msra.mxu0 0
        %2131 = vmatprep.subr.bf16.mxu0 0
        %2132 = vmatpush1.bf16.msra.mxu0 0
        %2133 = vmatprep.subr.bf16.mxu0 0
        %2134 = vmatpush1.bf16.msra.mxu0 0
        %2135 = vmatprep.subr.bf16.mxu0 0
        %2136 = vmatpush1.bf16.msra.mxu0 0
        %2137 = vmatprep.subr.bf16.mxu0 0
        %2138 = vmatpush1.bf16.msra.mxu0 0
        %2139 = vmatprep.subr.bf16.mxu0 0
        %2140 = vmatpush1.bf16.msra.mxu0 0
        %2141 = vmatprep.subr.bf16.mxu0 0
        %2142 = vmatpush1.bf16.msra.mxu0 0
        %2143 = vmatprep.subr.bf16.mxu0 0
        %2144 = vmatpush1.bf16.msra.mxu0 0
        %2145 = vmatprep.subr.bf16.mxu0 0
        %2146 = vmatpush1.bf16.msra.mxu0 0
        %2147 = vmatprep.subr.bf16.mxu0 0
        %2148 = vmatpush1.bf16.msra.mxu0 0
        %2149 = vmatprep.mubr.bf16.mxu0 0
        %2150 = vmatmul.mubr.bf16.gmra.mrb[0].mxu0 %v2112
        %v2151 = vpop.f32.mrb[0].mxu0
        %v2152 = vadd.f32 0.0, %v2151
        %v2153 = vpop.f32.mrb[0].mxu0
        %v2154 = vpop.f32.mrb[0].mxu0
        %v2155 = vpop.f32.mrb[0].mxu0
        %2156 = vdwg.mxu0
        %v2157 = vsel %vm740, %v2014, 0.0
        %v2158 = vsel %vm740, %v2060, 0.0
        %v2159 = vadd.f32 %v2157, %v2158
        %v2160 = vsel %vm740, %v2106, 0.0
        %v2161 = vadd.f32 %v2159, %v2160
        %v2162 = vsel %vm740, %v2152, 0.0
        %v2163 = vadd.f32 %v2161, %v2162
        %v2164 = vadd.f32 %v732, %v2163
        %v2165 = vld [vmem:[%s701] sm:$0x1]
        %v2167 = vlaneseq
        %v2168 = vshrl.u32 %v2167, 7
        %v2169 = vsub.s32 0, %v2168
        %v2170 = vrot.slane %v2165, %v2169
        %v2172 = vadd.f32 %v2164, %v2170
        %v2173 = vld [vmem:[%s704] sm:$0x1]
        %v2174 = vld [vmem:[%s707] sm:$0x1]
        %v2175 = vsel %vm740, %v2172, 0.0
        %2176 = vadd.xlane.f32.xlu0 %v2175
        %v2177 = vpop.xlane.xlu0 %2176
        %v2178 = vmul.f32 %v2177, %v744
        %v2179 = vsub.f32 %v2172, %v2178
        %v2180 = vmul.f32 %v2179, %v2179
        %v2181 = vsel %vm740, %v2180, 0.0
        %2182 = vadd.xlane.f32.xlu0 %v2181
        %v2183 = vpop.xlane.xlu0 %2182
        %v2184 = vmul.f32 %v2183, %v744
        %v2185 = vadd.f32 %v2184, 1e-05
        %v2186 = vrsqrt.pop %v2185
        %v2187 = vmul.f32 %v2179, %v2186
        %v2189 = vlaneseq
        %v2190 = vshrl.u32 %v2189, 7
        %v2191 = vsub.s32 0, %v2190
        %v2192 = vrot.slane %v2173, %v2191
        %v2194 = vmul.f32 %v2187, %v2192
        %v2196 = vlaneseq
        %v2197 = vshrl.u32 %v2196, 7
        %v2198 = vsub.s32 0, %v2197
        %v2199 = vrot.slane %v2174, %v2198
        %v2201 = vadd.f32 %v2194, %v2199
        %v2202 = vpack.c.bf16 %v2201, %v2201
        %v2203 = vld [vmem:[%s712] sm:$0xf]
        %v2204 = vld [vmem:[%s712 + $0x4] sm:$0xf]
        %v2205 = vld [vmem:[%s712 + $0x8] sm:$0xf]
        %v2206 = vld [vmem:[%s712 + $0xc] sm:$0xf]
        %v2207 = vld [vmem:[%s715] sm:$0x1]
        %v2209 = vlaneseq
        %v2210 = vshrl.u32 %v2209, 7
        %v2211 = vsub.s32 0, %v2210
        %v2212 = vrot.slane %v2207, %v2211
        %v2218 = vunpack.c.l.b16 %v2203
        %v2219 = vunpack.c.l.b16 %v2204
        %v2220 = vunpack.c.l.b16 %v2205
        %v2221 = vunpack.c.l.b16 %v2206
        %v2222 = vpack.c.b16 %v2219, %v2218
        %v2223 = vpack.c.b16 %v2221, %v2220
        %v2227 = vsel %vm740, %v2202, 0
        %2229 = vmatprep.subr.bf16.mxu0 0
        %2230 = vmatpush1.bf16.msra.mxu0 %v2222
        %2231 = vmatprep.subr.bf16.mxu0 0
        %2232 = vmatpush1.bf16.msra.mxu0 %v2223
        %2233 = vmatprep.subr.bf16.mxu0 0
        %2234 = vmatpush1.bf16.msra.mxu0 0
        %2235 = vmatprep.subr.bf16.mxu0 0
        %2236 = vmatpush1.bf16.msra.mxu0 0
        %2237 = vmatprep.subr.bf16.mxu0 0
        %2238 = vmatpush1.bf16.msra.mxu0 0
        %2239 = vmatprep.subr.bf16.mxu0 0
        %2240 = vmatpush1.bf16.msra.mxu0 0
        %2241 = vmatprep.subr.bf16.mxu0 0
        %2242 = vmatpush1.bf16.msra.mxu0 0
        %2243 = vmatprep.subr.bf16.mxu0 0
        %2244 = vmatpush1.bf16.msra.mxu0 0
        %2245 = vmatprep.subr.bf16.mxu0 0
        %2246 = vmatpush1.bf16.msra.mxu0 0
        %2247 = vmatprep.subr.bf16.mxu0 0
        %2248 = vmatpush1.bf16.msra.mxu0 0
        %2249 = vmatprep.subr.bf16.mxu0 0
        %2250 = vmatpush1.bf16.msra.mxu0 0
        %2251 = vmatprep.subr.bf16.mxu0 0
        %2252 = vmatpush1.bf16.msra.mxu0 0
        %2253 = vmatprep.subr.bf16.mxu0 0
        %2254 = vmatpush1.bf16.msra.mxu0 0
        %2255 = vmatprep.subr.bf16.mxu0 0
        %2256 = vmatpush1.bf16.msra.mxu0 0
        %2257 = vmatprep.subr.bf16.mxu0 0
        %2258 = vmatpush1.bf16.msra.mxu0 0
        %2259 = vmatprep.subr.bf16.mxu0 0
        %2260 = vmatpush1.bf16.msra.mxu0 0
        %2261 = vmatprep.mubr.bf16.mxu0 0
        %2262 = vmatmul.mubr.bf16.gmra.mrb[0].mxu0 %v2227
        %v2263 = vpop.f32.mrb[0].mxu0
        %v2264 = vadd.f32 %v2212, %v2263
        %v2265 = vpop.f32.mrb[0].mxu0
        %v2266 = vpop.f32.mrb[0].mxu0
        %v2267 = vpop.f32.mrb[0].mxu0
        %2268 = vdwg.mxu0
        %v2269 = vmul.f32 %v2264, 0.5
        %v2270 = vmul.f32 %v2264, 0.70710677
        %v2271 = verf.f32.pop %v2270
        %v2272 = vadd.f32 %v2271, 1.0
        %v2273 = vmul.f32 %v2269, %v2272
        %v2274 = vpack.c.bf16 %v2273, %v2273
        %v2275 = vld [vmem:[%s720] sm:$0xf]
        %v2276 = vld [vmem:[%s720 + $0x4] sm:$0xf]
        %v2277 = vld [vmem:[%s720 + $0x8] sm:$0xf]
        %v2278 = vld [vmem:[%s720 + $0xc] sm:$0xf]
        %v2279 = vld [vmem:[%s720 + $0x10] sm:$0xf]
        %v2280 = vld [vmem:[%s720 + $0x14] sm:$0xf]
        %v2281 = vld [vmem:[%s720 + $0x18] sm:$0xf]
        %v2282 = vld [vmem:[%s720 + $0x1c] sm:$0xf]
        %v2283 = vld [vmem:[%s720 + $0x20] sm:$0xf]
        %v2284 = vld [vmem:[%s720 + $0x24] sm:$0xf]
        %v2285 = vld [vmem:[%s720 + $0x28] sm:$0xf]
        %v2286 = vld [vmem:[%s720 + $0x2c] sm:$0xf]
        %v2287 = vld [vmem:[%s720 + $0x30] sm:$0xf]
        %v2288 = vld [vmem:[%s720 + $0x34] sm:$0xf]
        %v2289 = vld [vmem:[%s720 + $0x38] sm:$0xf]
        %v2290 = vld [vmem:[%s720 + $0x3c] sm:$0xf]
        %v2291 = vld [vmem:[%s723] sm:$0x1]
        %v2293 = vlaneseq
        %v2294 = vshrl.u32 %v2293, 7
        %v2295 = vsub.s32 0, %v2294
        %v2296 = vrot.slane %v2291, %v2295
        %v2314 = vunpack.c.l.b16 %v2275
        %v2315 = vunpack.c.l.b16 %v2276
        %v2316 = vunpack.c.l.b16 %v2277
        %v2317 = vunpack.c.l.b16 %v2278
        %v2318 = vunpack.c.l.b16 %v2279
        %v2319 = vunpack.c.l.b16 %v2280
        %v2320 = vunpack.c.l.b16 %v2281
        %v2321 = vunpack.c.l.b16 %v2282
        %v2322 = vunpack.c.l.b16 %v2283
        %v2323 = vunpack.c.l.b16 %v2284
        %v2324 = vunpack.c.l.b16 %v2285
        %v2325 = vunpack.c.l.b16 %v2286
        %v2326 = vunpack.c.l.b16 %v2287
        %v2327 = vunpack.c.l.b16 %v2288
        %v2328 = vunpack.c.l.b16 %v2289
        %v2329 = vunpack.c.l.b16 %v2290
        %v2330 = vpack.c.b16 %v2315, %v2314
        %v2331 = vpack.c.b16 %v2317, %v2316
        %v2332 = vpack.c.b16 %v2319, %v2318
        %v2333 = vpack.c.b16 %v2321, %v2320
        %v2334 = vpack.c.b16 %v2323, %v2322
        %v2335 = vpack.c.b16 %v2325, %v2324
        %v2336 = vpack.c.b16 %v2327, %v2326
        %v2337 = vpack.c.b16 %v2329, %v2328
        %2346 = vmatprep.subr.bf16.mxu0 0
        %2347 = vmatpush1.bf16.msra.mxu0 %v2330
        %2348 = vmatprep.subr.bf16.mxu0 0
        %2349 = vmatpush1.bf16.msra.mxu0 %v2331
        %2350 = vmatprep.subr.bf16.mxu0 0
        %2351 = vmatpush1.bf16.msra.mxu0 %v2332
        %2352 = vmatprep.subr.bf16.mxu0 0
        %2353 = vmatpush1.bf16.msra.mxu0 %v2333
        %2354 = vmatprep.subr.bf16.mxu0 0
        %2355 = vmatpush1.bf16.msra.mxu0 %v2334
        %2356 = vmatprep.subr.bf16.mxu0 0
        %2357 = vmatpush1.bf16.msra.mxu0 %v2335
        %2358 = vmatprep.subr.bf16.mxu0 0
        %2359 = vmatpush1.bf16.msra.mxu0 %v2336
        %2360 = vmatprep.subr.bf16.mxu0 0
        %2361 = vmatpush1.bf16.msra.mxu0 %v2337
        %2362 = vmatprep.subr.bf16.mxu0 0
        %2363 = vmatpush1.bf16.msra.mxu0 0
        %2364 = vmatprep.subr.bf16.mxu0 0
        %2365 = vmatpush1.bf16.msra.mxu0 0
        %2366 = vmatprep.subr.bf16.mxu0 0
        %2367 = vmatpush1.bf16.msra.mxu0 0
        %2368 = vmatprep.subr.bf16.mxu0 0
        %2369 = vmatpush1.bf16.msra.mxu0 0
        %2370 = vmatprep.subr.bf16.mxu0 0
        %2371 = vmatpush1.bf16.msra.mxu0 0
        %2372 = vmatprep.subr.bf16.mxu0 0
        %2373 = vmatpush1.bf16.msra.mxu0 0
        %2374 = vmatprep.subr.bf16.mxu0 0
        %2375 = vmatpush1.bf16.msra.mxu0 0
        %2376 = vmatprep.subr.bf16.mxu0 0
        %2377 = vmatpush1.bf16.msra.mxu0 0
        %2378 = vmatprep.mubr.bf16.mxu0 0
        %2379 = vmatmul.mubr.bf16.gmra.mrb[0].mxu0 %v2274
        %v2380 = vpop.f32.mrb[0].mxu0
        %v2381 = vadd.f32 %v2296, %v2380
        %v2382 = vpop.f32.mrb[0].mxu0
        %v2383 = vpop.f32.mrb[0].mxu0
        %v2384 = vpop.f32.mrb[0].mxu0
        %2385 = vdwg.mxu0
        %v2386 = vadd.f32 %v2172, %v2381
        %2387 = vst.msk [vmem:[#allocation2] sm:$0xff] %vm740, %v2386
        %p2388 = scmp.eq.s32.totalorder %s35, 1
        // Predicated region
        $region89: #{tpu_custom_call.1} parent=83 // pred_check
          %p2389 = pneg %p2388
        $region90: #{tpu_custom_call.1} parent=83 // pred_check_branch
          %2391 = sbr.rel (%p2389) target = $region92
        $region91: #{tpu_custom_call.1} parent=83 // pred_region
          %v2392 = vld [vmem:[%s13] sm:$0x1]
          %v2393 = vld [vmem:[%s14] sm:$0x1]
          %vm2394 = vcmask 261127
          %v2395 = vsel %vm2394, %v2386, 0.0
          %2396 = vadd.xlane.f32.xlu0 %v2395
          %v2397 = vpop.xlane.xlu0 %2396
          %v2398 = vmul.f32 %v2397, %v744
          %v2399 = vsub.f32 %v2386, %v2398
          %v2400 = vmul.f32 %v2399, %v2399
          %v2401 = vsel %vm2394, %v2400, 0.0
          %2402 = vadd.xlane.f32.xlu0 %v2401
          %v2403 = vpop.xlane.xlu0 %2402
          %v2404 = vmul.f32 %v2403, %v744
          %v2405 = vadd.f32 %v2404, 1e-05
          %v2406 = vrsqrt.pop %v2405
          %v2407 = vmul.f32 %v2399, %v2406
          %v2409 = vlaneseq
          %v2410 = vshrl.u32 %v2409, 7
          %v2411 = vsub.s32 0, %v2410
          %v2412 = vrot.slane %v2392, %v2411
          %v2414 = vmul.f32 %v2407, %v2412
          %v2416 = vlaneseq
          %v2417 = vshrl.u32 %v2416, 7
          %v2418 = vsub.s32 0, %v2417
          %v2419 = vrot.slane %v2393, %v2418
          %v2421 = vadd.f32 %v2414, %v2419
          %v2422 = vpack.c.bf16 %v2421, %v2421
          %v2423 = vld [vmem:[%s15] sm:$0xf]
          %v2424 = vld [vmem:[%s15 + $0x4] sm:$0xf]
          %v2425 = vld [vmem:[%s15 + $0x8] sm:$0xf]
          %v2426 = vld [vmem:[%s15 + $0xc] sm:$0xf]
          %v2428 = vshrl.u32 %v2422, 16
          %v2430 = vrot.slane %v2428, 3
          %v2435 = vunpack.c.l.b16 %v2423
          %v2436 = vunpack.c.l.b16 %v2424
          %v2437 = vunpack.c.l.b16 %v2425
          %v2438 = vunpack.c.l.b16 %v2426
          %v2439 = vpack.c.b16 %v2436, %v2435
          %v2440 = vpack.c.b16 %v2438, %v2437
          %v2444 = vsel %vm740, %v2430, 0
          %2446 = vmatprep.subr.bf16.mxu0 0
          %2447 = vmatpush1.bf16.msra.mxu0 %v2439
          %2448 = vmatprep.subr.bf16.mxu0 0
          %2449 = vmatpush1.bf16.msra.mxu0 %v2440
          %2450 = vmatprep.subr.bf16.mxu0 0
          %2451 = vmatpush1.bf16.msra.mxu0 0
          %2452 = vmatprep.subr.bf16.mxu0 0
          %2453 = vmatpush1.bf16.msra.mxu0 0
          %2454 = vmatprep.subr.bf16.mxu0 0
          %2455 = vmatpush1.bf16.msra.mxu0 0
          %2456 = vmatprep.subr.bf16.mxu0 0
          %2457 = vmatpush1.bf16.msra.mxu0 0
          %2458 = vmatprep.subr.bf16.mxu0 0
          %2459 = vmatpush1.bf16.msra.mxu0 0
          %2460 = vmatprep.subr.bf16.mxu0 0
          %2461 = vmatpush1.bf16.msra.mxu0 0
          %2462 = vmatprep.subr.bf16.mxu0 0
          %2463 = vmatpush1.bf16.msra.mxu0 0
          %2464 = vmatprep.subr.bf16.mxu0 0
          %2465 = vmatpush1.bf16.msra.mxu0 0
          %2466 = vmatprep.subr.bf16.mxu0 0
          %2467 = vmatpush1.bf16.msra.mxu0 0
          %2468 = vmatprep.subr.bf16.mxu0 0
          %2469 = vmatpush1.bf16.msra.mxu0 0
          %2470 = vmatprep.subr.bf16.mxu0 0
          %2471 = vmatpush1.bf16.msra.mxu0 0
          %2472 = vmatprep.subr.bf16.mxu0 0
          %2473 = vmatpush1.bf16.msra.mxu0 0
          %2474 = vmatprep.subr.bf16.mxu0 0
          %2475 = vmatpush1.bf16.msra.mxu0 0
          %2476 = vmatprep.subr.bf16.mxu0 0
          %2477 = vmatpush1.bf16.msra.mxu0 0
          %2478 = vmatprep.mubr.bf16.mxu0 0
          %2479 = vmatmul.mubr.bf16.gmra.mrb[0].mxu0 %v2444
          %v2480 = vpop.f32.mrb[0].mxu0
          %v2481 = vadd.f32 0.0, %v2480
          %v2482 = vpop.f32.mrb[0].mxu0
          %v2483 = vpop.f32.mrb[0].mxu0
          %v2484 = vpop.f32.mrb[0].mxu0
          %2485 = vdwg.mxu0
          %v2486 = vlaneseq
          %v2487 = vshrl.u32 %v2486, 7
          %v2488 = vsub.s32 0, %v2487
          %v2489 = vrot.slane %v2481, %v2488
          %2490 = vst [vmem:[%s674] sm:$0xff] %v2489
        $region92: #{tpu_custom_call.1} parent=83 // pred_fallthru
          _
        %s2491 = sand.u32 %s451, 1
        %s2492 = scalar_lea.sflag [#allocation4], %s2491
        %s2493 = sand.u32 %s451, 1
        %s2494 = smul.addr %s2493, 8
        %s2495 = scalar_lea.vmem [#allocation3], %s2494
        // Predicated region
        $region93: #{tpu_custom_call.1} parent=83 // pred_check
          %p2496 = pneg %p461
        $region94: #{tpu_custom_call.1} parent=83 // pred_check_branch
          %2498 = sbr.rel (%p2496) target = $region96
        $region95: #{tpu_custom_call.1} parent=83 // pred_region
          %s2500 = ssub.s32 128, 128
          %2501 = vsyncadd %s2492, %s2500
          %s2502 = smul.addr %s34, 128
          %s2503 = scalar_lea.hbm %s16, %s2502
          %s2505 = sshll.u32 %s2495, 4
          %s2506 = int_to_ptr.vmem [resolvable:$true] %s2505
          %2508 = dma.vmem_to_hbm [thread:$0]  %s2506, 128, %s2503, %s2492
        $region96: #{tpu_custom_call.1} parent=83 // pred_fallthru
          _
      $region84: #{tpu_custom_call.1} parent=5 // pred_fallthru
        _
      %p2509 = scmp.le.s32.totalorder 2, %s25
      // Predicated region
      $region97: #{tpu_custom_call.1} parent=5 // pred_check
        %p2510 = pneg %p2509
      $region98: #{tpu_custom_call.1} parent=5 // pred_check_branch
        %2512 = sbr.rel (%p2510) target = $region100
      $region99: #{tpu_custom_call.1} parent=5 // pred_region
        %s2513 = ssub.s32 %s25, 2
        // Predicated region
        $region101: #{tpu_custom_call.1} parent=99 // pred_check
          %p2514 = pneg %p467
        $region102: #{tpu_custom_call.1} parent=99 // pred_check_branch
          %2516 = sbr.rel (%p2514) target = $region104
        $region103: #{tpu_custom_call.1} parent=99 // pred_region
          %s2517 = sand.u32 %s452, 1
          %s2518 = scalar_lea.sflag [#allocation4], %s2517
          %s2519 = sand.u32 %s452, 1
          %s2520 = smul.addr %s2519, 8
          %s2521 = scalar_lea.vmem [#allocation3], %s2520
          %2522 = dma.done %s2518, 128
        $region104: #{tpu_custom_call.1} parent=99 // pred_fallthru
          _
      $region100: #{tpu_custom_call.1} parent=5 // pred_fallthru
        _
    $region6: #{tpu_custom_call.1} parent=1 // loop_footer
      %s29 = sadd.s32 1, %s25
    $region7: #{tpu_custom_call.1} parent=1 // loop_footer_branch
      %24 = sbr.rel target = $region3
    $region8: #{tpu_custom_call.1} parent=1 // loop_exit
      _
    %2523 = vsyncpa [#allocation4], 1
    %s2524 = scalar_lea.sflag [#allocation4], 1
    %2525 = vsyncpa %s2524, 1

</llo_original>
